<compile_context>
chip_gen: v6e
topology: v6e:2x2x1
jax: 0.10.0
libtpu: 0.0.40
codegen_flags: <defaults>
</compile_context>

<pallas_src>
import functools

import numpy as np

import jax
import jax.numpy as jnp
from jax.experimental import pallas as pl
from jax.experimental.pallas import tpu as pltpu


# ----------------------------------------------------------------------------
# Wrapper-side constant builders (tiny, trace-time layout plumbing)
# ----------------------------------------------------------------------------
def _wide_conv_weight(wt, wout, win_pad, cin, cout):
    """Fold a 3x3 conv's 3 horizontal taps into a block-structured weight.

    wt : (3, 3, cin, cout)  [kh, kw, cin, cout]
    Returns (3, win_pad*cin, wout*cout) with
        M[di, cin*(w+dj)+ci, cout*w+co] = wt[di, dj, ci, co]
    so that  out_row(h) = sum_di  in_row(h+di) @ M[di]
    for activations laid out as (rows = image row, lanes = width*channels).
    """
    eye = jnp.eye(wout, dtype=wt.dtype)
    rows = win_pad * cin
    per_di = []
    for di in range(3):
        acc = jnp.zeros((rows, wout * cout), wt.dtype)
        for dj in range(3):
            bd = jnp.kron(eye, wt[di, dj])                 # (wout*cin, wout*cout)
            acc = acc + jnp.pad(
                bd, ((cin * dj, rows - wout * cin - cin * dj), (0, 0)))
        per_di.append(acc)
    return jnp.stack(per_di)


def _pool_row_select(h_out, pad):
    """(h_out+2*pad, 2*h_out-1) 0/1 matrix picking row 2h into row h+pad."""
    m = np.zeros((h_out + 2 * pad, 2 * h_out - 1), np.float32)
    m[np.arange(h_out) + pad, 2 * np.arange(h_out)] = 1.0
    return m


def _pool_col_select(w_out, c, pad, odd):
    """(2*w_out*c, (w_out+2*pad)*c) 0/1 matrix: lane c*(2w+odd)+ch -> c*(w+pad)+ch."""
    m = np.zeros((2 * w_out * c, (w_out + 2 * pad) * c), np.float32)
    for w in range(w_out):
        for ch in range(c):
            m[c * (2 * w + odd) + ch, c * (w + pad) + ch] = 1.0
    return m


# ----------------------------------------------------------------------------
# Fused Pallas kernel (one batch element per grid step, everything in VMEM)
# ----------------------------------------------------------------------------
def _cnnnet_kernel(dims,
                   x_ref, w1_ref, b1_ref, rsel1_ref, csel1e_ref, csel1o_ref,
                   w2_ref, b2_ref, csel2e_ref, csel2o_ref,
                   w1blk_ref, bcl1_ref, wcl2_ref, bcl2_ref,
                   wh1_ref, bh1_ref, wh2_ref, bh2_ref,
                   y_ref, c_ref):
    H, Hq = dims
    f32 = jnp.float32
    Hh = H // 2

    xw = x_ref[0]                                   # (H+2, (W+2)*Cin)

    # ---- conv1 + ReLU: 3 row-shifted wide matmuls ---------------------------
    a1 = b1_ref[...]
    for di in range(3):
        a1 = a1 + jnp.dot(xw[di:di + H, :], w1_ref[di],
                          preferred_element_type=f32)
    a1 = jnp.maximum(a1, 0.0)                       # (H, W*C1)

    # ---- pool1 (2x2/2) + zero-pad ring: row-pair max + selection matmuls ----
    rm = jnp.maximum(a1[0:H - 1, :], a1[1:H, :])
    hp = jnp.maximum(
        jnp.dot(rm, csel1e_ref[...], preferred_element_type=f32),
        jnp.dot(rm, csel1o_ref[...], preferred_element_type=f32))
    p1 = jnp.dot(rsel1_ref[...], hp, preferred_element_type=f32)
    # p1: (H/2+2, (W/2+2)*C1) -- padded conv2 input, zeros in the pad ring.

    # ---- conv2 + ReLU --------------------------------------------------------
    a2 = b2_ref[...]
    for di in range(3):
        a2 = a2 + jnp.dot(p1[di:di + Hh, :], w2_ref[di],
                          preferred_element_type=f32)
    a2 = jnp.maximum(a2, 0.0)                       # (H/2, (W/2)*C2)

    # ---- pool2: row-pair max + column selection (row pick folded into cl1) ---
    rm2 = jnp.maximum(a2[0:Hh - 1, :], a2[1:Hh, :])
    hp2 = jnp.maximum(
        jnp.dot(rm2, csel2e_ref[...], preferred_element_type=f32),
        jnp.dot(rm2, csel2o_ref[...], preferred_element_type=f32))
    # hp2[2*hq, C2*wq + c] = pool2 output (hq, wq, c); odd rows are unused.

    # ---- head: cl1 (features never leave VMEM), cl2, h1, h2, tanh -----------
    y1 = bcl1_ref[...]
    for hq in range(Hq):
        y1 = y1 + jnp.dot(hp2[2 * hq:2 * hq + 1, :], w1blk_ref[hq],
                          preferred_element_type=f32)
    y1 = jnp.maximum(y1, 0.0)
    y2 = jnp.maximum(
        jnp.dot(y1, wcl2_ref[...], preferred_element_type=f32) + bcl2_ref[...],
        0.0)
    y_ref[0] = y2.astype(y_ref.dtype)
    g = jnp.maximum(
        jnp.dot(y2, wh1_ref[...], preferred_element_type=f32) + bh1_ref[...],
        0.0)
    c_ref[0] = jnp.tanh(
        jnp.dot(g, wh2_ref[...], preferred_element_type=f32)
        + bh2_ref[...]).astype(c_ref.dtype)


# ----------------------------------------------------------------------------
# CNNNet forward (alexnet branch): returns (y, b)
# ----------------------------------------------------------------------------
def cnnnet_forward(x, params):
    N, Cin, H, W = x.shape
    assert H % 4 == 0 and W % 4 == 0, "flat-lane layout assumes H, W divisible by 4"
    C1 = params["conv1_w"].shape[0]
    C2 = params["conv2_w"].shape[0]
    Hq, Wq = H // 4, W // 4
    H1 = params["cl1_w"].shape[1]
    H2 = params["cl2_w"].shape[1]
    H3 = params["h1_w"].shape[1]
    CL = params["h2_w"].shape[1]
    assert params["cl1_w"].shape[0] == C2 * Hq * Wq

    # ---- one-time layout plumbing (tiny XLA ops) -----------------------------
    # NCHW -> NHWC -> pad 1 ring -> lanes = (padded w, cin)
    xw = jnp.pad(jnp.transpose(x, (0, 2, 3, 1)), ((0, 0), (1, 1), (1, 1), (0, 0)))
    xw = xw.reshape(N, H + 2, (W + 2) * Cin)

    w1t = jnp.transpose(params["conv1_w"], (2, 3, 1, 0))       # (kh,kw,Cin,C1)
    w2t = jnp.transpose(params["conv2_w"], (2, 3, 1, 0))       # (kh,kw,C1,C2)
    w1wide = _wide_conv_weight(w1t, W, W + 2, Cin, C1)          # (3,(W+2)Cin,W*C1)
    w2wide = _wide_conv_weight(w2t, W // 2, W // 2 + 2, C1, C2)
    b1w = jnp.tile(params["conv1_b"], W).reshape(1, W * C1)
    b2w = jnp.tile(params["conv2_b"], W // 2).reshape(1, (W // 2) * C2)

    rsel1 = jnp.asarray(_pool_row_select(H // 2, 1))            # (H/2+2, H-1)
    csel1e = jnp.asarray(_pool_col_select(W // 2, C1, 1, 0))    # (W*C1,(W/2+2)C1)
    csel1o = jnp.asarray(_pool_col_select(W // 2, C1, 1, 1))
    csel2e = jnp.asarray(_pool_col_select(Wq, C2, 0, 0))        # ((W/2)C2, Wq*C2)
    csel2o = jnp.asarray(_pool_col_select(Wq, C2, 0, 1))

    # cl1 weight rows permuted so the in-VMEM (row-strip hq, lane C2*wq+c)
    # feature layout contracts directly against it (torch NCHW flatten order:
    # feature index = c*Hq*Wq + hq*Wq + wq).
    feat_idx = np.empty((Hq, Wq * C2), np.int32)
    for hq in range(Hq):
        for wq in range(Wq):
            for c in range(C2):
                feat_idx[hq, C2 * wq + c] = c * (Hq * Wq) + hq * Wq + wq
    w1blk = params["cl1_w"][jnp.asarray(feat_idx)]              # (Hq, Wq*C2, H1)

    bcl1 = params["cl1_b"].reshape(1, H1)
    wcl2, bcl2 = params["cl2_w"], params["cl2_b"].reshape(1, H2)
    wh1, bh1 = params["h1_w"], params["h1_b"].reshape(1, H3)
    wh2, bh2 = params["h2_w"], params["h2_b"].reshape(1, CL)

    # ---- cost estimate (advisory) --------------------------------------------
    flops_per_n = (
        3 * 2 * H * ((W + 2) * Cin) * (W * C1)                     # conv1
        + 2 * 2 * (H - 1) * (W * C1) * ((W // 2 + 2) * C1)         # pool1 cols
        + 2 * (H // 2 + 2) * (H - 1) * ((W // 2 + 2) * C1)         # pool1 rows
        + 3 * 2 * (H // 2) * ((W // 2 + 2) * C1) * ((W // 2) * C2)  # conv2
        + 2 * 2 * (H // 2 - 1) * ((W // 2) * C2) * (Wq * C2)       # pool2 cols
        + 2 * (Hq * Wq * C2) * H1 + 2 * H1 * H2 + 2 * H2 * H3 + 2 * H3 * CL)
    const_bytes = 4 * (w1wide.size + w2wide.size + rsel1.size
                       + csel1e.size + csel1o.size + csel2e.size + csel2o.size
                       + w1blk.size + wcl2.size + wh1.size + wh2.size
                       + b1w.size + b2w.size + H1 + H2 + H3 + CL)
    cost = pl.CostEstimate(flops=N * flops_per_n, transcendentals=N * CL,
                           bytes_accessed=int(4 * xw.size + const_bytes
                                              + 4 * N * (H2 + CL)))

    full2 = lambda n: (0, 0)
    full3 = lambda n: (0, 0, 0)
    y3, b3 = pl.pallas_call(
        functools.partial(_cnnnet_kernel, (H, Hq)),
        out_shape=(jax.ShapeDtypeStruct((N, 1, H2), jnp.float32),
                   jax.ShapeDtypeStruct((N, 1, CL), jnp.float32)),
        grid=(N,),
        in_specs=[
            pl.BlockSpec((1, H + 2, (W + 2) * Cin), lambda n: (n, 0, 0)),
            pl.BlockSpec(w1wide.shape, full3), pl.BlockSpec(b1w.shape, full2),
            pl.BlockSpec(rsel1.shape, full2),
            pl.BlockSpec(csel1e.shape, full2), pl.BlockSpec(csel1o.shape, full2),
            pl.BlockSpec(w2wide.shape, full3), pl.BlockSpec(b2w.shape, full2),
            pl.BlockSpec(csel2e.shape, full2), pl.BlockSpec(csel2o.shape, full2),
            pl.BlockSpec(w1blk.shape, full3), pl.BlockSpec((1, H1), full2),
            pl.BlockSpec((H1, H2), full2), pl.BlockSpec((1, H2), full2),
            pl.BlockSpec((H2, H3), full2), pl.BlockSpec((1, H3), full2),
            pl.BlockSpec((H3, CL), full2), pl.BlockSpec((1, CL), full2),
        ],
        out_specs=[pl.BlockSpec((1, 1, H2), lambda n: (n, 0, 0)),
                   pl.BlockSpec((1, 1, CL), lambda n: (n, 0, 0))],
        compiler_params=pltpu.CompilerParams(
            dimension_semantics=("parallel",)),
        cost_estimate=cost,
    )(xw, w1wide, b1w, rsel1, csel1e, csel1o, w2wide, b2w, csel2e, csel2o,
      w1blk, bcl1, wcl2, bcl2, wh1, bh1, wh2, bh2)
    return y3[:, 0, :], b3[:, 0, :]


# ----------------------------------------------------------------------------
# Parameters (scaled-down AlexNet-style stack), torch layouts
# ----------------------------------------------------------------------------
def init_params(key, code_length=16):
    ks = jax.random.split(key, 8)
    p = {}
    # features: two 3x3/s1/p1 convs with 2x2 max-pools, torch OIHW layout
    p["conv1_w"] = jax.random.normal(ks[0], (8, 3, 3, 3), jnp.float32) * 0.1
    p["conv1_b"] = jnp.zeros((8,), jnp.float32)
    p["conv2_w"] = jax.random.normal(ks[1], (16, 8, 3, 3), jnp.float32) * 0.1
    p["conv2_b"] = jnp.zeros((16,), jnp.float32)
    # classifier: Linear(256,64)+ReLU, Linear(64,64)+ReLU   ((in,out) layout)
    p["cl1_w"] = jax.random.normal(ks[2], (256, 64), jnp.float32) * 0.05
    p["cl1_b"] = jax.random.normal(ks[3], (64,), jnp.float32) * 0.01
    p["cl2_w"] = jax.random.normal(ks[4], (64, 64), jnp.float32) * 0.05
    p["cl2_b"] = jax.random.normal(ks[5], (64,), jnp.float32) * 0.01
    # hash: DC_initialize_weights -> normal(0, 0.01) weights, zero bias
    p["h1_w"] = jax.random.normal(ks[6], (64, 32), jnp.float32) * 0.01
    p["h1_b"] = jnp.zeros((32,), jnp.float32)
    p["h2_w"] = jax.random.normal(ks[7], (32, code_length), jnp.float32) * 0.01
    p["h2_b"] = jnp.zeros((code_length,), jnp.float32)
    return p


# ----------------------------------------------------------------------------
# Pure-JAX (XLA) reference for a correctness sanity check
# ----------------------------------------------------------------------------
def _reference_forward(x, params):
    dn = ("NCHW", "OIHW", "NCHW")
    f = jax.lax.conv_general_dilated(x, params["conv1_w"], (1, 1),
                                     ((1, 1), (1, 1)), dimension_numbers=dn)
    f = jax.nn.relu(f + params["conv1_b"][None, :, None, None])
    f = jax.lax.reduce_window(f, -jnp.inf, jax.lax.max,
                              (1, 1, 2, 2), (1, 1, 2, 2), "VALID")
    f = jax.lax.conv_general_dilated(f, params["conv2_w"], (1, 1),
                                     ((1, 1), (1, 1)), dimension_numbers=dn)
    f = jax.nn.relu(f + params["conv2_b"][None, :, None, None])
    f = jax.lax.reduce_window(f, -jnp.inf, jax.lax.max,
                              (1, 1, 2, 2), (1, 1, 2, 2), "VALID")
    f = f.reshape(f.shape[0], -1)
    y = jax.nn.relu(f @ params["cl1_w"] + params["cl1_b"])
    y = jax.nn.relu(y @ params["cl2_w"] + params["cl2_b"])
    h = jax.nn.relu(y @ params["h1_w"] + params["h1_b"])
    b = jnp.tanh(h @ params["h2_w"] + params["h2_b"])
    return y, b


if __name__ == "__main__":
    key = jax.random.PRNGKey(0)
    k_x, k_p = jax.random.split(key)
    x = jax.random.normal(k_x, (2, 3, 16, 16), jnp.float32)   # NCHW
    params = init_params(k_p, code_length=16)

    y, b = jax.jit(cnnnet_forward)(x, params)
    jax.block_until_ready((y, b))

    assert y.shape == (2, 64) and b.shape == (2, 16)
    assert bool(jnp.all(jnp.isfinite(y))) and bool(jnp.all(jnp.isfinite(b)))
    assert bool(jnp.all(jnp.abs(b) <= 1.0))   # tanh output range

    # sanity check against a pure-XLA reference (loose tol: MXU matmul rounding)
    y_xla, b_xla = _reference_forward(x, params)
    assert float(jnp.max(jnp.abs(y - y_xla))) < 5e-2
    assert float(jnp.max(jnp.abs(b - b_xla))) < 5e-2

    print("KERNEL_OK")
</pallas_src>

<mosaic_0001>
module attributes {stable_mosaic.version = 11 : i64} {
  func.func @_cnnnet_kernel(%arg0: i32, %arg1: memref<1x18x54xf32, #tpu.memory_space<vmem>>, %arg2: memref<3x54x128xf32, #tpu.memory_space<vmem>>, %arg3: memref<1x128xf32, #tpu.memory_space<vmem>>, %arg4: memref<10x15xf32, #tpu.memory_space<vmem>>, %arg5: memref<128x80xf32, #tpu.memory_space<vmem>>, %arg6: memref<128x80xf32, #tpu.memory_space<vmem>>, %arg7: memref<3x80x128xf32, #tpu.memory_space<vmem>>, %arg8: memref<1x128xf32, #tpu.memory_space<vmem>>, %arg9: memref<128x64xf32, #tpu.memory_space<vmem>>, %arg10: memref<128x64xf32, #tpu.memory_space<vmem>>, %arg11: memref<4x64x64xf32, #tpu.memory_space<vmem>>, %arg12: memref<1x64xf32, #tpu.memory_space<vmem>>, %arg13: memref<64x64xf32, #tpu.memory_space<vmem>>, %arg14: memref<1x64xf32, #tpu.memory_space<vmem>>, %arg15: memref<64x32xf32, #tpu.memory_space<vmem>>, %arg16: memref<1x32xf32, #tpu.memory_space<vmem>>, %arg17: memref<32x16xf32, #tpu.memory_space<vmem>>, %arg18: memref<1x16xf32, #tpu.memory_space<vmem>>, %arg19: memref<1x1x64xf32, #tpu.memory_space<vmem>>, %arg20: memref<1x1x16xf32, #tpu.memory_space<vmem>>) attributes {dimension_semantics = [#tpu.dimension_semantics<parallel>], iteration_bounds = array<i64: 2>, scalar_prefetch = 0 : i64, scratch_operands = 0 : i64, tpu.core_type = #tpu.core_type<tc>, window_params = [{transform_indices = @transform_0, window_bounds = array<i64: 1, 18, 54>}, {pipeline_mode = #tpu.pipeline_mode<synchronous>, transform_indices = @transform_1, window_bounds = array<i64: 3, 54, 128>}, {pipeline_mode = #tpu.pipeline_mode<synchronous>, transform_indices = @transform_2, window_bounds = array<i64: 1, 128>}, {pipeline_mode = #tpu.pipeline_mode<synchronous>, transform_indices = @transform_3, window_bounds = array<i64: 10, 15>}, {pipeline_mode = #tpu.pipeline_mode<synchronous>, transform_indices = @transform_4, window_bounds = array<i64: 128, 80>}, {pipeline_mode = #tpu.pipeline_mode<synchronous>, transform_indices = @transform_5, window_bounds = array<i64: 128, 80>}, {pipeline_mode = #tpu.pipeline_mode<synchronous>, transform_indices = @transform_6, window_bounds = array<i64: 3, 80, 128>}, {pipeline_mode = #tpu.pipeline_mode<synchronous>, transform_indices = @transform_7, window_bounds = array<i64: 1, 128>}, {pipeline_mode = #tpu.pipeline_mode<synchronous>, transform_indices = @transform_8, window_bounds = array<i64: 128, 64>}, {pipeline_mode = #tpu.pipeline_mode<synchronous>, transform_indices = @transform_9, window_bounds = array<i64: 128, 64>}, {pipeline_mode = #tpu.pipeline_mode<synchronous>, transform_indices = @transform_10, window_bounds = array<i64: 4, 64, 64>}, {pipeline_mode = #tpu.pipeline_mode<synchronous>, transform_indices = @transform_11, window_bounds = array<i64: 1, 64>}, {pipeline_mode = #tpu.pipeline_mode<synchronous>, transform_indices = @transform_12, window_bounds = array<i64: 64, 64>}, {pipeline_mode = #tpu.pipeline_mode<synchronous>, transform_indices = @transform_13, window_bounds = array<i64: 1, 64>}, {pipeline_mode = #tpu.pipeline_mode<synchronous>, transform_indices = @transform_14, window_bounds = array<i64: 64, 32>}, {pipeline_mode = #tpu.pipeline_mode<synchronous>, transform_indices = @transform_15, window_bounds = array<i64: 1, 32>}, {pipeline_mode = #tpu.pipeline_mode<synchronous>, transform_indices = @transform_16, window_bounds = array<i64: 32, 16>}, {pipeline_mode = #tpu.pipeline_mode<synchronous>, transform_indices = @transform_17, window_bounds = array<i64: 1, 16>}, {transform_indices = @transform_18, window_bounds = array<i64: 1, 1, 64>}, {transform_indices = @transform_19, window_bounds = array<i64: 1, 1, 16>}]} {
    %c0 = arith.constant 0 : index
    %c0_0 = arith.constant 0 : index
    %c0_1 = arith.constant 0 : index
    %0 = vector.load %arg1[%c0, %c0_0, %c0_1] : memref<1x18x54xf32, #tpu.memory_space<vmem>>, vector<1x18x54xf32>
    %1 = vector.shape_cast %0 : vector<1x18x54xf32> to vector<18x54xf32>
    %c0_2 = arith.constant 0 : index
    %c0_3 = arith.constant 0 : index
    %2 = vector.load %arg3[%c0_2, %c0_3] : memref<1x128xf32, #tpu.memory_space<vmem>>, vector<1x128xf32>
    %3 = vector.extract_strided_slice %1 {offsets = [0, 0], sizes = [16, 54], strides = [1, 1]} : vector<18x54xf32> to vector<16x54xf32>
    %c0_4 = arith.constant 0 : index
    %c0_5 = arith.constant 0 : index
    %c0_6 = arith.constant 0 : index
    %4 = vector.load %arg2[%c0_4, %c0_5, %c0_6] : memref<3x54x128xf32, #tpu.memory_space<vmem>>, vector<1x54x128xf32>
    %5 = vector.shape_cast %4 : vector<1x54x128xf32> to vector<54x128xf32>
    %cst = arith.constant dense<0.000000e+00> : vector<16x128xf32>
    %6 = tpu.matmul %3, %5, %cst {dimension_numbers = #tpu.dot_dimension_numbers<[1], [0], [0], [1], [0, 0, 1, 1], [], []>} : vector<16x54xf32>, vector<54x128xf32>, vector<16x128xf32> -> vector<16x128xf32>
    %7 = vector.broadcast %2 : vector<1x128xf32> to vector<16x128xf32>
    %8 = arith.addf %7, %6 : vector<16x128xf32>
    %9 = vector.extract_strided_slice %1 {offsets = [1, 0], sizes = [16, 54], strides = [1, 1]} : vector<18x54xf32> to vector<16x54xf32>
    %c1 = arith.constant 1 : index
    %c0_7 = arith.constant 0 : index
    %c0_8 = arith.constant 0 : index
    %10 = vector.load %arg2[%c1, %c0_7, %c0_8] : memref<3x54x128xf32, #tpu.memory_space<vmem>>, vector<1x54x128xf32>
    %11 = vector.shape_cast %10 : vector<1x54x128xf32> to vector<54x128xf32>
    %cst_9 = arith.constant dense<0.000000e+00> : vector<16x128xf32>
    %12 = tpu.matmul %9, %11, %cst_9 {dimension_numbers = #tpu.dot_dimension_numbers<[1], [0], [0], [1], [0, 0, 1, 1], [], []>} : vector<16x54xf32>, vector<54x128xf32>, vector<16x128xf32> -> vector<16x128xf32>
    %13 = arith.addf %8, %12 : vector<16x128xf32>
    %14 = vector.extract_strided_slice %1 {offsets = [2, 0], sizes = [16, 54], strides = [1, 1]} : vector<18x54xf32> to vector<16x54xf32>
    %c2 = arith.constant 2 : index
    %c0_10 = arith.constant 0 : index
    %c0_11 = arith.constant 0 : index
    %15 = vector.load %arg2[%c2, %c0_10, %c0_11] : memref<3x54x128xf32, #tpu.memory_space<vmem>>, vector<1x54x128xf32>
    %16 = vector.shape_cast %15 : vector<1x54x128xf32> to vector<54x128xf32>
    %cst_12 = arith.constant dense<0.000000e+00> : vector<16x128xf32>
    %17 = tpu.matmul %14, %16, %cst_12 {dimension_numbers = #tpu.dot_dimension_numbers<[1], [0], [0], [1], [0, 0, 1, 1], [], []>} : vector<16x54xf32>, vector<54x128xf32>, vector<16x128xf32> -> vector<16x128xf32>
    %18 = arith.addf %13, %17 : vector<16x128xf32>
    %cst_13 = arith.constant 0.000000e+00 : f32
    %19 = vector.broadcast %cst_13 : f32 to vector<16x128xf32>
    %20 = arith.maximumf %18, %19 : vector<16x128xf32>
    %21 = vector.extract_strided_slice %20 {offsets = [0, 0], sizes = [15, 128], strides = [1, 1]} : vector<16x128xf32> to vector<15x128xf32>
    %22 = vector.extract_strided_slice %20 {offsets = [1, 0], sizes = [15, 128], strides = [1, 1]} : vector<16x128xf32> to vector<15x128xf32>
    %23 = arith.maximumf %21, %22 : vector<15x128xf32>
    %c0_14 = arith.constant 0 : index
    %c0_15 = arith.constant 0 : index
    %24 = vector.load %arg5[%c0_14, %c0_15] : memref<128x80xf32, #tpu.memory_space<vmem>>, vector<128x80xf32>
    %cst_16 = arith.constant dense<0.000000e+00> : vector<15x80xf32>
    %25 = tpu.matmul %23, %24, %cst_16 {dimension_numbers = #tpu.dot_dimension_numbers<[1], [0], [0], [1], [0, 0, 1, 1], [], []>} : vector<15x128xf32>, vector<128x80xf32>, vector<15x80xf32> -> vector<15x80xf32>
    %c0_17 = arith.constant 0 : index
    %c0_18 = arith.constant 0 : index
    %26 = vector.load %arg6[%c0_17, %c0_18] : memref<128x80xf32, #tpu.memory_space<vmem>>, vector<128x80xf32>
    %cst_19 = arith.constant dense<0.000000e+00> : vector<15x80xf32>
    %27 = tpu.matmul %23, %26, %cst_19 {dimension_numbers = #tpu.dot_dimension_numbers<[1], [0], [0], [1], [0, 0, 1, 1], [], []>} : vector<15x128xf32>, vector<128x80xf32>, vector<15x80xf32> -> vector<15x80xf32>
    %28 = arith.maximumf %25, %27 : vector<15x80xf32>
    %c0_20 = arith.constant 0 : index
    %c0_21 = arith.constant 0 : index
    %29 = vector.load %arg4[%c0_20, %c0_21] : memref<10x15xf32, #tpu.memory_space<vmem>>, vector<10x15xf32>
    %cst_22 = arith.constant dense<0.000000e+00> : vector<10x80xf32>
    %30 = tpu.matmul %29, %28, %cst_22 {dimension_numbers = #tpu.dot_dimension_numbers<[1], [0], [0], [1], [0, 0, 1, 1], [], []>} : vector<10x15xf32>, vector<15x80xf32>, vector<10x80xf32> -> vector<10x80xf32>
    %c0_23 = arith.constant 0 : index
    %c0_24 = arith.constant 0 : index
    %31 = vector.load %arg8[%c0_23, %c0_24] : memref<1x128xf32, #tpu.memory_space<vmem>>, vector<1x128xf32>
    %32 = vector.extract_strided_slice %30 {offsets = [0, 0], sizes = [8, 80], strides = [1, 1]} : vector<10x80xf32> to vector<8x80xf32>
    %c0_25 = arith.constant 0 : index
    %c0_26 = arith.constant 0 : index
    %c0_27 = arith.constant 0 : index
    %33 = vector.load %arg7[%c0_25, %c0_26, %c0_27] : memref<3x80x128xf32, #tpu.memory_space<vmem>>, vector<1x80x128xf32>
    %34 = vector.shape_cast %33 : vector<1x80x128xf32> to vector<80x128xf32>
    %cst_28 = arith.constant dense<0.000000e+00> : vector<8x128xf32>
    %35 = tpu.matmul %32, %34, %cst_28 {dimension_numbers = #tpu.dot_dimension_numbers<[1], [0], [0], [1], [0, 0, 1, 1], [], []>} : vector<8x80xf32>, vector<80x128xf32>, vector<8x128xf32> -> vector<8x128xf32>
    %36 = vector.broadcast %31 : vector<1x128xf32> to vector<8x128xf32>
    %37 = arith.addf %36, %35 : vector<8x128xf32>
    %38 = vector.extract_strided_slice %30 {offsets = [1, 0], sizes = [8, 80], strides = [1, 1]} : vector<10x80xf32> to vector<8x80xf32>
    %c1_29 = arith.constant 1 : index
    %c0_30 = arith.constant 0 : index
    %c0_31 = arith.constant 0 : index
    %39 = vector.load %arg7[%c1_29, %c0_30, %c0_31] : memref<3x80x128xf32, #tpu.memory_space<vmem>>, vector<1x80x128xf32>
    %40 = vector.shape_cast %39 : vector<1x80x128xf32> to vector<80x128xf32>
    %cst_32 = arith.constant dense<0.000000e+00> : vector<8x128xf32>
    %41 = tpu.matmul %38, %40, %cst_32 {dimension_numbers = #tpu.dot_dimension_numbers<[1], [0], [0], [1], [0, 0, 1, 1], [], []>} : vector<8x80xf32>, vector<80x128xf32>, vector<8x128xf32> -> vector<8x128xf32>
    %42 = arith.addf %37, %41 : vector<8x128xf32>
    %43 = vector.extract_strided_slice %30 {offsets = [2, 0], sizes = [8, 80], strides = [1, 1]} : vector<10x80xf32> to vector<8x80xf32>
    %c2_33 = arith.constant 2 : index
    %c0_34 = arith.constant 0 : index
    %c0_35 = arith.constant 0 : index
    %44 = vector.load %arg7[%c2_33, %c0_34, %c0_35] : memref<3x80x128xf32, #tpu.memory_space<vmem>>, vector<1x80x128xf32>
    %45 = vector.shape_cast %44 : vector<1x80x128xf32> to vector<80x128xf32>
    %cst_36 = arith.constant dense<0.000000e+00> : vector<8x128xf32>
    %46 = tpu.matmul %43, %45, %cst_36 {dimension_numbers = #tpu.dot_dimension_numbers<[1], [0], [0], [1], [0, 0, 1, 1], [], []>} : vector<8x80xf32>, vector<80x128xf32>, vector<8x128xf32> -> vector<8x128xf32>
    %47 = arith.addf %42, %46 : vector<8x128xf32>
    %cst_37 = arith.constant 0.000000e+00 : f32
    %48 = vector.broadcast %cst_37 : f32 to vector<8x128xf32>
    %49 = arith.maximumf %47, %48 : vector<8x128xf32>
    %50 = vector.extract_strided_slice %49 {offsets = [0, 0], sizes = [7, 128], strides = [1, 1]} : vector<8x128xf32> to vector<7x128xf32>
    %51 = vector.extract_strided_slice %49 {offsets = [1, 0], sizes = [7, 128], strides = [1, 1]} : vector<8x128xf32> to vector<7x128xf32>
    %52 = arith.maximumf %50, %51 : vector<7x128xf32>
    %c0_38 = arith.constant 0 : index
    %c0_39 = arith.constant 0 : index
    %53 = vector.load %arg9[%c0_38, %c0_39] : memref<128x64xf32, #tpu.memory_space<vmem>>, vector<128x64xf32>
    %cst_40 = arith.constant dense<0.000000e+00> : vector<7x64xf32>
    %54 = tpu.matmul %52, %53, %cst_40 {dimension_numbers = #tpu.dot_dimension_numbers<[1], [0], [0], [1], [0, 0, 1, 1], [], []>} : vector<7x128xf32>, vector<128x64xf32>, vector<7x64xf32> -> vector<7x64xf32>
    %c0_41 = arith.constant 0 : index
    %c0_42 = arith.constant 0 : index
    %55 = vector.load %arg10[%c0_41, %c0_42] : memref<128x64xf32, #tpu.memory_space<vmem>>, vector<128x64xf32>
    %cst_43 = arith.constant dense<0.000000e+00> : vector<7x64xf32>
    %56 = tpu.matmul %52, %55, %cst_43 {dimension_numbers = #tpu.dot_dimension_numbers<[1], [0], [0], [1], [0, 0, 1, 1], [], []>} : vector<7x128xf32>, vector<128x64xf32>, vector<7x64xf32> -> vector<7x64xf32>
    %57 = arith.maximumf %54, %56 : vector<7x64xf32>
    %c0_44 = arith.constant 0 : index
    %c0_45 = arith.constant 0 : index
    %58 = vector.load %arg12[%c0_44, %c0_45] : memref<1x64xf32, #tpu.memory_space<vmem>>, vector<1x64xf32>
    %59 = vector.extract_strided_slice %57 {offsets = [0, 0], sizes = [1, 64], strides = [1, 1]} : vector<7x64xf32> to vector<1x64xf32>
    %c0_46 = arith.constant 0 : index
    %c0_47 = arith.constant 0 : index
    %c0_48 = arith.constant 0 : index
    %60 = vector.load %arg11[%c0_46, %c0_47, %c0_48] : memref<4x64x64xf32, #tpu.memory_space<vmem>>, vector<1x64x64xf32>
    %61 = vector.shape_cast %60 : vector<1x64x64xf32> to vector<64x64xf32>
    %cst_49 = arith.constant dense<0.000000e+00> : vector<1x64xf32>
    %62 = tpu.matmul %59, %61, %cst_49 {dimension_numbers = #tpu.dot_dimension_numbers<[1], [0], [0], [1], [0, 0, 1, 1], [], []>} : vector<1x64xf32>, vector<64x64xf32>, vector<1x64xf32> -> vector<1x64xf32>
    %63 = arith.addf %58, %62 : vector<1x64xf32>
    %64 = vector.extract_strided_slice %57 {offsets = [2, 0], sizes = [1, 64], strides = [1, 1]} : vector<7x64xf32> to vector<1x64xf32>
    %c1_50 = arith.constant 1 : index
    %c0_51 = arith.constant 0 : index
    %c0_52 = arith.constant 0 : index
    %65 = vector.load %arg11[%c1_50, %c0_51, %c0_52] : memref<4x64x64xf32, #tpu.memory_space<vmem>>, vector<1x64x64xf32>
    %66 = vector.shape_cast %65 : vector<1x64x64xf32> to vector<64x64xf32>
    %cst_53 = arith.constant dense<0.000000e+00> : vector<1x64xf32>
    %67 = tpu.matmul %64, %66, %cst_53 {dimension_numbers = #tpu.dot_dimension_numbers<[1], [0], [0], [1], [0, 0, 1, 1], [], []>} : vector<1x64xf32>, vector<64x64xf32>, vector<1x64xf32> -> vector<1x64xf32>
    %68 = arith.addf %63, %67 : vector<1x64xf32>
    %69 = vector.extract_strided_slice %57 {offsets = [4, 0], sizes = [1, 64], strides = [1, 1]} : vector<7x64xf32> to vector<1x64xf32>
    %c2_54 = arith.constant 2 : index
    %c0_55 = arith.constant 0 : index
    %c0_56 = arith.constant 0 : index
    %70 = vector.load %arg11[%c2_54, %c0_55, %c0_56] : memref<4x64x64xf32, #tpu.memory_space<vmem>>, vector<1x64x64xf32>
    %71 = vector.shape_cast %70 : vector<1x64x64xf32> to vector<64x64xf32>
    %cst_57 = arith.constant dense<0.000000e+00> : vector<1x64xf32>
    %72 = tpu.matmul %69, %71, %cst_57 {dimension_numbers = #tpu.dot_dimension_numbers<[1], [0], [0], [1], [0, 0, 1, 1], [], []>} : vector<1x64xf32>, vector<64x64xf32>, vector<1x64xf32> -> vector<1x64xf32>
    %73 = arith.addf %68, %72 : vector<1x64xf32>
    %74 = vector.extract_strided_slice %57 {offsets = [6, 0], sizes = [1, 64], strides = [1, 1]} : vector<7x64xf32> to vector<1x64xf32>
    %c3 = arith.constant 3 : index
    %c0_58 = arith.constant 0 : index
    %c0_59 = arith.constant 0 : index
    %75 = vector.load %arg11[%c3, %c0_58, %c0_59] : memref<4x64x64xf32, #tpu.memory_space<vmem>>, vector<1x64x64xf32>
    %76 = vector.shape_cast %75 : vector<1x64x64xf32> to vector<64x64xf32>
    %cst_60 = arith.constant dense<0.000000e+00> : vector<1x64xf32>
    %77 = tpu.matmul %74, %76, %cst_60 {dimension_numbers = #tpu.dot_dimension_numbers<[1], [0], [0], [1], [0, 0, 1, 1], [], []>} : vector<1x64xf32>, vector<64x64xf32>, vector<1x64xf32> -> vector<1x64xf32>
    %78 = arith.addf %73, %77 : vector<1x64xf32>
    %cst_61 = arith.constant 0.000000e+00 : f32
    %79 = vector.broadcast %cst_61 : f32 to vector<1x64xf32>
    %80 = arith.maximumf %78, %79 : vector<1x64xf32>
    %c0_62 = arith.constant 0 : index
    %c0_63 = arith.constant 0 : index
    %81 = vector.load %arg13[%c0_62, %c0_63] : memref<64x64xf32, #tpu.memory_space<vmem>>, vector<64x64xf32>
    %cst_64 = arith.constant dense<0.000000e+00> : vector<1x64xf32>
    %82 = tpu.matmul %80, %81, %cst_64 {dimension_numbers = #tpu.dot_dimension_numbers<[1], [0], [0], [1], [0, 0, 1, 1], [], []>} : vector<1x64xf32>, vector<64x64xf32>, vector<1x64xf32> -> vector<1x64xf32>
    %c0_65 = arith.constant 0 : index
    %c0_66 = arith.constant 0 : index
    %83 = vector.load %arg14[%c0_65, %c0_66] : memref<1x64xf32, #tpu.memory_space<vmem>>, vector<1x64xf32>
    %84 = arith.addf %82, %83 : vector<1x64xf32>
    %cst_67 = arith.constant 0.000000e+00 : f32
    %85 = vector.broadcast %cst_67 : f32 to vector<1x64xf32>
    %86 = arith.maximumf %84, %85 : vector<1x64xf32>
    %c0_68 = arith.constant 0 : index
    %c0_69 = arith.constant 0 : index
    %c0_70 = arith.constant 0 : index
    %87 = vector.load %arg19[%c0_68, %c0_69, %c0_70] : memref<1x1x64xf32, #tpu.memory_space<vmem>>, vector<1x1x64xf32>
    %88 = vector.shape_cast %87 : vector<1x1x64xf32> to vector<1x64xf32>
    %89 = vector.shape_cast %86 : vector<1x64xf32> to vector<1x1x64xf32>
    tpu.vector_store %arg19[%c0_68, %c0_69, %c0_70], %89 {strides = array<i32>} : memref<1x1x64xf32, #tpu.memory_space<vmem>>, vector<1x1x64xf32>,
    %c0_71 = arith.constant 0 : index
    %c0_72 = arith.constant 0 : index
    %90 = vector.load %arg15[%c0_71, %c0_72] : memref<64x32xf32, #tpu.memory_space<vmem>>, vector<64x32xf32>
    %cst_73 = arith.constant dense<0.000000e+00> : vector<1x32xf32>
    %91 = tpu.matmul %86, %90, %cst_73 {dimension_numbers = #tpu.dot_dimension_numbers<[1], [0], [0], [1], [0, 0, 1, 1], [], []>} : vector<1x64xf32>, vector<64x32xf32>, vector<1x32xf32> -> vector<1x32xf32>
    %c0_74 = arith.constant 0 : index
    %c0_75 = arith.constant 0 : index
    %92 = vector.load %arg16[%c0_74, %c0_75] : memref<1x32xf32, #tpu.memory_space<vmem>>, vector<1x32xf32>
    %93 = arith.addf %91, %92 : vector<1x32xf32>
    %cst_76 = arith.constant 0.000000e+00 : f32
    %94 = vector.broadcast %cst_76 : f32 to vector<1x32xf32>
    %95 = arith.maximumf %93, %94 : vector<1x32xf32>
    %c0_77 = arith.constant 0 : index
    %c0_78 = arith.constant 0 : index
    %96 = vector.load %arg17[%c0_77, %c0_78] : memref<32x16xf32, #tpu.memory_space<vmem>>, vector<32x16xf32>
    %cst_79 = arith.constant dense<0.000000e+00> : vector<1x16xf32>
    %97 = tpu.matmul %95, %96, %cst_79 {dimension_numbers = #tpu.dot_dimension_numbers<[1], [0], [0], [1], [0, 0, 1, 1], [], []>} : vector<1x32xf32>, vector<32x16xf32>, vector<1x16xf32> -> vector<1x16xf32>
    %c0_80 = arith.constant 0 : index
    %c0_81 = arith.constant 0 : index
    %98 = vector.load %arg18[%c0_80, %c0_81] : memref<1x16xf32, #tpu.memory_space<vmem>>, vector<1x16xf32>
    %99 = arith.addf %97, %98 : vector<1x16xf32>
    %100 = math.tanh %99 : vector<1x16xf32>
    %c0_82 = arith.constant 0 : index
    %c0_83 = arith.constant 0 : index
    %c0_84 = arith.constant 0 : index
    %101 = vector.load %arg20[%c0_82, %c0_83, %c0_84] : memref<1x1x16xf32, #tpu.memory_space<vmem>>, vector<1x1x16xf32>
    %102 = vector.shape_cast %101 : vector<1x1x16xf32> to vector<1x16xf32>
    %103 = vector.shape_cast %100 : vector<1x16xf32> to vector<1x1x16xf32>
    tpu.vector_store %arg20[%c0_82, %c0_83, %c0_84], %103 {strides = array<i32>} : memref<1x1x16xf32, #tpu.memory_space<vmem>>, vector<1x1x16xf32>,
    return
  }
  func.func @transform_0(%arg0: i32) -> (i32, i32, i32) {
    %c0_i32 = arith.constant 0 : i32
    %c0_i32_0 = arith.constant 0 : i32
    %c0_i32_1 = arith.constant 0 : i32
    return %arg0, %c0_i32, %c0_i32_0 : i32, i32, i32
  }
  func.func @transform_1(%arg0: i32) -> (i32, i32, i32) {
    %c0_i32 = arith.constant 0 : i32
    %c0_i32_0 = arith.constant 0 : i32
    %c0_i32_1 = arith.constant 0 : i32
    %c0_i32_2 = arith.constant 0 : i32
    return %c0_i32, %c0_i32_0, %c0_i32_1 : i32, i32, i32
  }
  func.func @transform_2(%arg0: i32) -> (i32, i32) {
    %c0_i32 = arith.constant 0 : i32
    %c0_i32_0 = arith.constant 0 : i32
    %c0_i32_1 = arith.constant 0 : i32
    return %c0_i32, %c0_i32_0 : i32, i32
  }
  func.func @transform_3(%arg0: i32) -> (i32, i32) {
    %c0_i32 = arith.constant 0 : i32
    %c0_i32_0 = arith.constant 0 : i32
    %c0_i32_1 = arith.constant 0 : i32
    return %c0_i32, %c0_i32_0 : i32, i32
  }
  func.func @transform_4(%arg0: i32) -> (i32, i32) {
    %c0_i32 = arith.constant 0 : i32
    %c0_i32_0 = arith.constant 0 : i32
    %c0_i32_1 = arith.constant 0 : i32
    return %c0_i32, %c0_i32_0 : i32, i32
  }
  func.func @transform_5(%arg0: i32) -> (i32, i32) {
    %c0_i32 = arith.constant 0 : i32
    %c0_i32_0 = arith.constant 0 : i32
    %c0_i32_1 = arith.constant 0 : i32
    return %c0_i32, %c0_i32_0 : i32, i32
  }
  func.func @transform_6(%arg0: i32) -> (i32, i32, i32) {
    %c0_i32 = arith.constant 0 : i32
    %c0_i32_0 = arith.constant 0 : i32
    %c0_i32_1 = arith.constant 0 : i32
    %c0_i32_2 = arith.constant 0 : i32
    return %c0_i32, %c0_i32_0, %c0_i32_1 : i32, i32, i32
  }
  func.func @transform_7(%arg0: i32) -> (i32, i32) {
    %c0_i32 = arith.constant 0 : i32
    %c0_i32_0 = arith.constant 0 : i32
    %c0_i32_1 = arith.constant 0 : i32
    return %c0_i32, %c0_i32_0 : i32, i32
  }
  func.func @transform_8(%arg0: i32) -> (i32, i32) {
    %c0_i32 = arith.constant 0 : i32
    %c0_i32_0 = arith.constant 0 : i32
    %c0_i32_1 = arith.constant 0 : i32
    return %c0_i32, %c0_i32_0 : i32, i32
  }
  func.func @transform_9(%arg0: i32) -> (i32, i32) {
    %c0_i32 = arith.constant 0 : i32
    %c0_i32_0 = arith.constant 0 : i32
    %c0_i32_1 = arith.constant 0 : i32
    return %c0_i32, %c0_i32_0 : i32, i32
  }
  func.func @transform_10(%arg0: i32) -> (i32, i32, i32) {
    %c0_i32 = arith.constant 0 : i32
    %c0_i32_0 = arith.constant 0 : i32
    %c0_i32_1 = arith.constant 0 : i32
    %c0_i32_2 = arith.constant 0 : i32
    return %c0_i32, %c0_i32_0, %c0_i32_1 : i32, i32, i32
  }
  func.func @transform_11(%arg0: i32) -> (i32, i32) {
    %c0_i32 = arith.constant 0 : i32
    %c0_i32_0 = arith.constant 0 : i32
    %c0_i32_1 = arith.constant 0 : i32
    return %c0_i32, %c0_i32_0 : i32, i32
  }
  func.func @transform_12(%arg0: i32) -> (i32, i32) {
    %c0_i32 = arith.constant 0 : i32
    %c0_i32_0 = arith.constant 0 : i32
    %c0_i32_1 = arith.constant 0 : i32
    return %c0_i32, %c0_i32_0 : i32, i32
  }
  func.func @transform_13(%arg0: i32) -> (i32, i32) {
    %c0_i32 = arith.constant 0 : i32
    %c0_i32_0 = arith.constant 0 : i32
    %c0_i32_1 = arith.constant 0 : i32
    return %c0_i32, %c0_i32_0 : i32, i32
  }
  func.func @transform_14(%arg0: i32) -> (i32, i32) {
    %c0_i32 = arith.constant 0 : i32
    %c0_i32_0 = arith.constant 0 : i32
    %c0_i32_1 = arith.constant 0 : i32
    return %c0_i32, %c0_i32_0 : i32, i32
  }
  func.func @transform_15(%arg0: i32) -> (i32, i32) {
    %c0_i32 = arith.constant 0 : i32
    %c0_i32_0 = arith.constant 0 : i32
    %c0_i32_1 = arith.constant 0 : i32
    return %c0_i32, %c0_i32_0 : i32, i32
  }
  func.func @transform_16(%arg0: i32) -> (i32, i32) {
    %c0_i32 = arith.constant 0 : i32
    %c0_i32_0 = arith.constant 0 : i32
    %c0_i32_1 = arith.constant 0 : i32
    return %c0_i32, %c0_i32_0 : i32, i32
  }
  func.func @transform_17(%arg0: i32) -> (i32, i32) {
    %c0_i32 = arith.constant 0 : i32
    %c0_i32_0 = arith.constant 0 : i32
    %c0_i32_1 = arith.constant 0 : i32
    return %c0_i32, %c0_i32_0 : i32, i32
  }
  func.func @transform_18(%arg0: i32) -> (i32, i32, i32) {
    %c0_i32 = arith.constant 0 : i32
    %c0_i32_0 = arith.constant 0 : i32
    %c0_i32_1 = arith.constant 0 : i32
    return %arg0, %c0_i32, %c0_i32_0 : i32, i32, i32
  }
  func.func @transform_19(%arg0: i32) -> (i32, i32, i32) {
    %c0_i32 = arith.constant 0 : i32
    %c0_i32_0 = arith.constant 0 : i32
    %c0_i32_1 = arith.constant 0 : i32
    return %arg0, %c0_i32, %c0_i32_0 : i32, i32, i32
  }
}

</mosaic_0001>

<llo_original>
// kernel: tile.13
$region0: #{tile.13}
  #allocation0 [shape = 's32[1]{0}', space=sflag, size = 0x4, scoped, tag = 'scoped memory for tile.13']
  %s0 = inlined_call_operand.vmem [shape: f32[8], index: 0, kind: input, shape index: {}]
  %s1 = inlined_call_operand.vmem [shape: f32[16,8], index: 1, kind: output, shape index: {}]
  // Predicated region
  $region2: #{tile.13} parent=0 // pred_check
    _
  $region3: #{tile.13} parent=0 // pred_check_branch
    %3 = sbr.rel (0) target = $region5
  $region4: #{tile.13} parent=0 // pred_region
    _
  $region5: #{tile.13} parent=0 // pred_fallthru
    _
  %v4 = vld [vmem:[%s0] ss:$0 sm:$0xff]
  %5 = vst [vmem:[%s1] sm:$0xff] %v4
  %s6 = scalar_lea.vmem %s1, 8
  %7 = vst [vmem:[%s6] sm:$0xff] %v4

// kernel: tile.14
$region0: #{tile.14}
  %s0 = inlined_call_operand.vmem [shape: f32[16,8], index: 0, kind: input, shape index: {}]
  %s1 = inlined_call_operand.vmem [shape: f32[1,128], index: 1, kind: output, shape index: {}]
  $region1: #{tile.14} parent=0
    #allocation0 [shape = 'u8[4096]{0}', space=vmem, size = 0x1000, scoped, tag = 'scoped mem for output reshape']
    %v2 = vld [vmem:[%s0] sm:$0x1]
    %vm3 = vcmask 64512
    %4 = vst.msk [vmem:[#allocation0] sm:$0x1] %vm3, %v2
    %s5 = scalar_lea.vmem %s0, 15
    %v6 = vld [vmem:[%s5] sm:$0x1]
    %7 = vrot.lane.b32.xlu0 %v6, 120
    %v8 = vpop.permute.xlu0 %7
    %vm9 = vcmask 1048512
    %10 = vst.msk [vmem:[#allocation0] sm:$0x1] %vm9, %v8
    %s11 = scalar_lea.vmem %s0, 14
    %v12 = vld [vmem:[%s11] sm:$0x1]
    %13 = vrot.lane.b32.xlu0 %v12, 112
    %v14 = vpop.permute.xlu0 %13
    %vm15 = vcmask 982912
    %16 = vst.msk [vmem:[#allocation0] sm:$0x1] %vm15, %v14
    %s17 = scalar_lea.vmem %s0, 13
    %v18 = vld [vmem:[%s17] sm:$0x1]
    %19 = vrot.lane.b32.xlu0 %v18, 104
    %v20 = vpop.permute.xlu0 %19
    %vm21 = vcmask 917312
    %22 = vst.msk [vmem:[#allocation0] sm:$0x1] %vm21, %v20
    %s23 = scalar_lea.vmem %s0, 12
    %v24 = vld [vmem:[%s23] sm:$0x1]
    %25 = vrot.lane.b32.xlu0 %v24, 96
    %v26 = vpop.permute.xlu0 %25
    %vm27 = vcmask 851712
    %28 = vst.msk [vmem:[#allocation0] sm:$0x1] %vm27, %v26
    %s29 = scalar_lea.vmem %s0, 11
    %v30 = vld [vmem:[%s29] sm:$0x1]
    %31 = vrot.lane.b32.xlu0 %v30, 88
    %v32 = vpop.permute.xlu0 %31
    %vm33 = vcmask 786112
    %34 = vst.msk [vmem:[#allocation0] sm:$0x1] %vm33, %v32
    %s35 = scalar_lea.vmem %s0, 10
    %v36 = vld [vmem:[%s35] sm:$0x1]
    %37 = vrot.lane.b32.xlu0 %v36, 80
    %v38 = vpop.permute.xlu0 %37
    %vm39 = vcmask 720512
    %40 = vst.msk [vmem:[#allocation0] sm:$0x1] %vm39, %v38
    %s41 = scalar_lea.vmem %s0, 9
    %v42 = vld [vmem:[%s41] sm:$0x1]
    %43 = vrot.lane.b32.xlu0 %v42, 72
    %v44 = vpop.permute.xlu0 %43
    %vm45 = vcmask 654912
    %46 = vst.msk [vmem:[#allocation0] sm:$0x1] %vm45, %v44
    %s47 = scalar_lea.vmem %s0, 8
    %v48 = vld [vmem:[%s47] sm:$0x1]
    %49 = vrot.lane.b32.xlu0 %v48, 64
    %v50 = vpop.permute.xlu0 %49
    %vm51 = vcmask 589312
    %52 = vst.msk [vmem:[#allocation0] sm:$0x1] %vm51, %v50
    %s53 = scalar_lea.vmem %s0, 7
    %v54 = vld [vmem:[%s53] sm:$0x1]
    %55 = vrot.lane.b32.xlu0 %v54, 56
    %v56 = vpop.permute.xlu0 %55
    %vm57 = vcmask 523712
    %58 = vst.msk [vmem:[#allocation0] sm:$0x1] %vm57, %v56
    %s59 = scalar_lea.vmem %s0, 6
    %v60 = vld [vmem:[%s59] sm:$0x1]
    %61 = vrot.lane.b32.xlu0 %v60, 48
    %v62 = vpop.permute.xlu0 %61
    %vm63 = vcmask 458112
    %64 = vst.msk [vmem:[#allocation0] sm:$0x1] %vm63, %v62
    %s65 = scalar_lea.vmem %s0, 5
    %v66 = vld [vmem:[%s65] sm:$0x1]
    %67 = vrot.lane.b32.xlu0 %v66, 40
    %v68 = vpop.permute.xlu0 %67
    %vm69 = vcmask 392512
    %70 = vst.msk [vmem:[#allocation0] sm:$0x1] %vm69, %v68
    %s71 = scalar_lea.vmem %s0, 4
    %v72 = vld [vmem:[%s71] sm:$0x1]
    %73 = vrot.lane.b32.xlu0 %v72, 32
    %v74 = vpop.permute.xlu0 %73
    %vm75 = vcmask 326912
    %76 = vst.msk [vmem:[#allocation0] sm:$0x1] %vm75, %v74
    %s77 = scalar_lea.vmem %s0, 3
    %v78 = vld [vmem:[%s77] sm:$0x1]
    %79 = vrot.lane.b32.xlu0 %v78, 24
    %v80 = vpop.permute.xlu0 %79
    %vm81 = vcmask 261312
    %82 = vst.msk [vmem:[#allocation0] sm:$0x1] %vm81, %v80
    %s83 = scalar_lea.vmem %s0, 2
    %v84 = vld [vmem:[%s83] sm:$0x1]
    %85 = vrot.lane.b32.xlu0 %v84, 16
    %v86 = vpop.permute.xlu0 %85
    %vm87 = vcmask 195712
    %88 = vst.msk [vmem:[#allocation0] sm:$0x1] %vm87, %v86
    %s89 = scalar_lea.vmem %s0, 1
    %v90 = vld [vmem:[%s89] sm:$0x1]
    %91 = vrot.lane.b32.xlu0 %v90, 8
    %v92 = vpop.permute.xlu0 %91
    %vm93 = vcmask 130112
    %94 = vst.msk [vmem:[#allocation0] sm:$0x1] %vm93, %v92
    %s96 = sshll.u32 1, 1
    %s97 = ssub.s32 %s96, 1
    %v99 = vld [vmem:[#allocation0] sm:%s97]
    %s100 = sshll.u32 1, 1
    %s101 = ssub.s32 %s100, 1
    %102 = vst [vmem:[%s1] sm:%s101] %v99

// kernel: tile.18
$region0: #{tile.18}
  #allocation0 [shape = 's32[1]{0}', space=sflag, size = 0x4, scoped, tag = 'scoped memory for tile.18']
  %s0 = inlined_call_operand.vmem [shape: f32[16], index: 0, kind: input, shape index: {}]
  %s1 = inlined_call_operand.vmem [shape: f32[8,16], index: 1, kind: output, shape index: {}]
  // Predicated region
  $region2: #{tile.18} parent=0 // pred_check
    _
  $region3: #{tile.18} parent=0 // pred_check_branch
    %3 = sbr.rel (0) target = $region5
  $region4: #{tile.18} parent=0 // pred_region
    _
  $region5: #{tile.18} parent=0 // pred_fallthru
    _
  %v4 = vld [vmem:[%s0] ss:$0 sm:$0xff]
  %5 = vst [vmem:[%s1] sm:$0xff] %v4

// kernel: tile.19
$region0: #{tile.19}
  %s0 = inlined_call_operand.vmem [shape: f32[8,16], index: 0, kind: input, shape index: {}]
  %s1 = inlined_call_operand.vmem [shape: f32[1,128], index: 1, kind: output, shape index: {}]
  $region1: #{tile.19} parent=0
    #allocation0 [shape = 'u8[4096]{0}', space=vmem, size = 0x1000, scoped, tag = 'scoped mem for output reshape']
    %v2 = vld [vmem:[%s0] sm:$0x1]
    %vm3 = vcmask 130048
    %4 = vst.msk [vmem:[#allocation0] sm:$0x1] %vm3, %v2
    %s5 = scalar_lea.vmem %s0, 7
    %v6 = vld [vmem:[%s5] sm:$0x1]
    %7 = vrot.lane.b32.xlu0 %v6, 112
    %v8 = vpop.permute.xlu0 %7
    %vm9 = vcmask 1048448
    %10 = vst.msk [vmem:[#allocation0] sm:$0x1] %vm9, %v8
    %s11 = scalar_lea.vmem %s0, 6
    %v12 = vld [vmem:[%s11] sm:$0x1]
    %13 = vrot.lane.b32.xlu0 %v12, 96
    %v14 = vpop.permute.xlu0 %13
    %vm15 = vcmask 917248
    %16 = vst.msk [vmem:[#allocation0] sm:$0x1] %vm15, %v14
    %s17 = scalar_lea.vmem %s0, 5
    %v18 = vld [vmem:[%s17] sm:$0x1]
    %19 = vrot.lane.b32.xlu0 %v18, 80
    %v20 = vpop.permute.xlu0 %19
    %vm21 = vcmask 786048
    %22 = vst.msk [vmem:[#allocation0] sm:$0x1] %vm21, %v20
    %s23 = scalar_lea.vmem %s0, 4
    %v24 = vld [vmem:[%s23] sm:$0x1]
    %25 = vrot.lane.b32.xlu0 %v24, 64
    %v26 = vpop.permute.xlu0 %25
    %vm27 = vcmask 654848
    %28 = vst.msk [vmem:[#allocation0] sm:$0x1] %vm27, %v26
    %s29 = scalar_lea.vmem %s0, 3
    %v30 = vld [vmem:[%s29] sm:$0x1]
    %31 = vrot.lane.b32.xlu0 %v30, 48
    %v32 = vpop.permute.xlu0 %31
    %vm33 = vcmask 523648
    %34 = vst.msk [vmem:[#allocation0] sm:$0x1] %vm33, %v32
    %s35 = scalar_lea.vmem %s0, 2
    %v36 = vld [vmem:[%s35] sm:$0x1]
    %37 = vrot.lane.b32.xlu0 %v36, 32
    %v38 = vpop.permute.xlu0 %37
    %vm39 = vcmask 392448
    %40 = vst.msk [vmem:[#allocation0] sm:$0x1] %vm39, %v38
    %s41 = scalar_lea.vmem %s0, 1
    %v42 = vld [vmem:[%s41] sm:$0x1]
    %43 = vrot.lane.b32.xlu0 %v42, 16
    %v44 = vpop.permute.xlu0 %43
    %vm45 = vcmask 261248
    %46 = vst.msk [vmem:[#allocation0] sm:$0x1] %vm45, %v44
    %s48 = sshll.u32 1, 1
    %s49 = ssub.s32 %s48, 1
    %v51 = vld [vmem:[#allocation0] sm:%s49]
    %s52 = sshll.u32 1, 1
    %s53 = ssub.s32 %s52, 1
    %54 = vst [vmem:[%s1] sm:%s53] %v51

// kernel: cnnnet_forward.1
$region0: #{cnnnet_forward.1}
  #allocation0 [shape = 'u32[]', space=smem, size = 0x4, offset = 0x4, fixed_abs, tag = 'smem constant byte address 0x4 - core index']
  #allocation1 [shape = 'u32[144,128]{1,0:T(1,128)}', space=vmem, size = 0x12000, scoped, tag = 'internal scratch']
  %s0 = inlined_call_operand.vmem [shape: f32[2,18,54], index: 0, kind: input, shape index: {}]
  %s1 = inlined_call_operand.vmem [shape: f32[3,54,128], index: 1, kind: input, shape index: {}]
  %s2 = inlined_call_operand.vmem [shape: f32[1,128], index: 2, kind: input, shape index: {}]
  %s3 = inlined_call_operand.vmem [shape: f32[10,15], index: 3, kind: input, shape index: {}]
  %s4 = inlined_call_operand.vmem [shape: f32[128,80], index: 4, kind: input, shape index: {}]
  %s5 = inlined_call_operand.vmem [shape: f32[128,80], index: 5, kind: input, shape index: {}]
  %s6 = inlined_call_operand.vmem [shape: f32[3,80,128], index: 6, kind: input, shape index: {}]
  %s7 = inlined_call_operand.vmem [shape: f32[1,128], index: 7, kind: input, shape index: {}]
  %s8 = inlined_call_operand.vmem [shape: f32[128,64], index: 8, kind: input, shape index: {}]
  %s9 = inlined_call_operand.vmem [shape: f32[128,64], index: 9, kind: input, shape index: {}]
  %s10 = inlined_call_operand.vmem [shape: f32[4,64,64], index: 10, kind: input, shape index: {}]
  %s11 = inlined_call_operand.vmem [shape: f32[1,64], index: 11, kind: input, shape index: {}]
  %s12 = inlined_call_operand.vmem [shape: f32[64,64], index: 12, kind: input, shape index: {}]
  %s13 = inlined_call_operand.vmem [shape: f32[1,64], index: 13, kind: input, shape index: {}]
  %s14 = inlined_call_operand.vmem [shape: f32[64,32], index: 14, kind: input, shape index: {}]
  %s15 = inlined_call_operand.vmem [shape: f32[1,32], index: 15, kind: input, shape index: {}]
  %s16 = inlined_call_operand.vmem [shape: f32[32,16], index: 16, kind: input, shape index: {}]
  %s17 = inlined_call_operand.vmem [shape: f32[1,16], index: 17, kind: input, shape index: {}]
  %s18 = inlined_call_operand.hbm [shape: f32[2,1,64], index: 18, kind: output, shape index: {0}]
  %s19 = inlined_call_operand.hbm [shape: f32[2,1,16], index: 19, kind: output, shape index: {1}]
  %20 = xla_tuple %s18, %s19
  %s21 = sld [smem:[#allocation0]]
  $region113: #{cnnnet_forward.1} parent=0
    _
  %s23 = ssub.s32 1, %s21
  %s24 = scalar_select 0, %s23, %s21
  $region1: #{cnnnet_forward.1} parent=0
    #allocation2 [shape = 'u8[1024]{0}', space=vmem, size = 0x400, scoped, tag = 'output window, operand 0']
    #allocation3 [shape = 's32[2]{0}', space=sflag, size = 0x8, scoped, tag = 'scoped memory for cnnnet_forward.1']
    #allocation4 [shape = 'u8[1024]{0}', space=vmem, size = 0x400, scoped, tag = 'output window, operand 1']
    #allocation5 [shape = 's32[2]{0}', space=sflag, size = 0x8, scoped, tag = 'scoped memory for cnnnet_forward.1']
    %25 = vsyncpa [#allocation3], 0
    %s26 = scalar_lea.sflag [#allocation3], 1
    %27 = vsyncpa %s26, 0
    %28 = vsyncpa [#allocation5], 0
    %s29 = scalar_lea.sflag [#allocation5], 1
    %30 = vsyncpa %s29, 0
    loop: start=0, step=1, limit=4
    $region2: #{cnnnet_forward.1} parent=1 // loop_pre_header
      _
    $region3: #{cnnnet_forward.1} parent=1 // loop_header
      %s32 = sphi 0, %s36
      %p33 = scmp.ge.s32.totalorder %s32, 4
      %s42 = sphi 0, %s44
      %s45 = sphi 0, %s42
      %s46 = sphi 0, %s45
      %s62 = sphi 0, %s46
      %s66 = sphi 0, %s66
      %s68 = sphi 0, %s66
      %s69 = sphi 0, %s68
      %s83 = sphi 0, %s69
      %s87 = sphi 0, %s87
      %s89 = sphi 0, %s87
      %s90 = sphi 0, %s89
      %s104 = sphi 0, %s90
      %s108 = sphi 0, %s108
      %s110 = sphi 0, %s108
      %s111 = sphi 0, %s110
      %s125 = sphi 0, %s111
      %s129 = sphi 0, %s129
      %s131 = sphi 0, %s129
      %s132 = sphi 0, %s131
      %s146 = sphi 0, %s132
      %s150 = sphi 0, %s150
      %s152 = sphi 0, %s150
      %s153 = sphi 0, %s152
      %s167 = sphi 0, %s153
      %s171 = sphi 0, %s171
      %s173 = sphi 0, %s171
      %s174 = sphi 0, %s173
      %s188 = sphi 0, %s174
      %s192 = sphi 0, %s192
      %s194 = sphi 0, %s192
      %s195 = sphi 0, %s194
      %s209 = sphi 0, %s195
      %s213 = sphi 0, %s213
      %s215 = sphi 0, %s213
      %s216 = sphi 0, %s215
      %s230 = sphi 0, %s216
      %s234 = sphi 0, %s234
      %s236 = sphi 0, %s234
      %s237 = sphi 0, %s236
      %s251 = sphi 0, %s237
      %s255 = sphi 0, %s255
      %s257 = sphi 0, %s255
      %s258 = sphi 0, %s257
      %s272 = sphi 0, %s258
      %s276 = sphi 0, %s276
      %s278 = sphi 0, %s276
      %s279 = sphi 0, %s278
      %s293 = sphi 0, %s279
      %s297 = sphi 0, %s297
      %s299 = sphi 0, %s297
      %s300 = sphi 0, %s299
      %s314 = sphi 0, %s300
      %s318 = sphi 0, %s318
      %s320 = sphi 0, %s318
      %s321 = sphi 0, %s320
      %s335 = sphi 0, %s321
      %s339 = sphi 0, %s339
      %s341 = sphi 0, %s339
      %s342 = sphi 0, %s341
      %s356 = sphi 0, %s342
      %s360 = sphi 0, %s360
      %s362 = sphi 0, %s360
      %s363 = sphi 0, %s362
      %s377 = sphi 0, %s363
      %s381 = sphi 0, %s381
      %s383 = sphi 0, %s381
      %s384 = sphi 0, %s383
      %s398 = sphi 0, %s384
      %s402 = sphi 0, %s402
      %s404 = sphi 0, %s402
      %s405 = sphi 0, %s404
      %s419 = sphi 0, %s405
      %s425 = sphi 0, %s427
      %s428 = sphi 0, %s425
      %s429 = sphi 0, %s428
      %s445 = sphi 0, %s429
      %s451 = sphi 0, %s453
      %s454 = sphi 0, %s451
      %s455 = sphi 0, %s454
      %s471 = sphi 0, %s455
    $region4: #{cnnnet_forward.1} parent=1 // loop_header_branch
      %35 = sbr.rel (%p33) target = $region8
    $region5: #{cnnnet_forward.1} parent=1 // loop_body
      %s37 = ssub.s32 %s32, 1
      %s38 = ssub.s32 %s32, 2
      %s39 = sadd.s32 %s32, 1
      %s40 = ssub.s32 %s32, %s39
      %p41 = scmp.eq.s32.totalorder %s40, 0
      %s43 = sadd.s32 %s42, 1
      %s44 = scalar_select %p41, %s42, %s43
      %p47 = pneg %p41
      %p48 = scmp.eq.s32.totalorder %s32, 1
      %p49 = por %p47, %p48
      %p50 = scmp.ne.s32.totalorder %s42, %s45
      %p51 = scmp.eq.s32.totalorder %s32, 0
      %p52 = por %p50, %p51
      %p53 = scmp.ne.s32.totalorder %s42, %s45
      %p54 = scmp.eq.s32.totalorder %s37, 1
      %p55 = por %p53, %p54
      %p56 = scmp.ne.s32.totalorder %s45, %s46
      %p57 = scmp.eq.s32.totalorder %s37, 0
      %p58 = por %p56, %p57
      %p59 = scmp.ne.s32.totalorder %s45, %s46
      %p60 = scmp.eq.s32.totalorder %s38, 1
      %p61 = por %p59, %p60
      %p63 = scmp.ne.s32.totalorder %s46, %s62
      %p64 = scmp.eq.s32.totalorder %s38, 0
      %p65 = por %p63, %p64
      %s67 = sadd.s32 %s66, 1
      %p70 = scmp.eq.s32.totalorder %s32, 1
      %p71 = scmp.ne.s32.totalorder %s66, %s68
      %p72 = scmp.eq.s32.totalorder %s32, 0
      %p73 = por %p71, %p72
      %p74 = scmp.ne.s32.totalorder %s66, %s68
      %p75 = scmp.eq.s32.totalorder %s37, 1
      %p76 = por %p74, %p75
      %p77 = scmp.ne.s32.totalorder %s68, %s69
      %p78 = scmp.eq.s32.totalorder %s37, 0
      %p79 = por %p77, %p78
      %p80 = scmp.ne.s32.totalorder %s68, %s69
      %p81 = scmp.eq.s32.totalorder %s38, 1
      %p82 = por %p80, %p81
      %p84 = scmp.ne.s32.totalorder %s69, %s83
      %p85 = scmp.eq.s32.totalorder %s38, 0
      %p86 = por %p84, %p85
      %s88 = sadd.s32 %s87, 1
      %p91 = scmp.eq.s32.totalorder %s32, 1
      %p92 = scmp.ne.s32.totalorder %s87, %s89
      %p93 = scmp.eq.s32.totalorder %s32, 0
      %p94 = por %p92, %p93
      %p95 = scmp.ne.s32.totalorder %s87, %s89
      %p96 = scmp.eq.s32.totalorder %s37, 1
      %p97 = por %p95, %p96
      %p98 = scmp.ne.s32.totalorder %s89, %s90
      %p99 = scmp.eq.s32.totalorder %s37, 0
      %p100 = por %p98, %p99
      %p101 = scmp.ne.s32.totalorder %s89, %s90
      %p102 = scmp.eq.s32.totalorder %s38, 1
      %p103 = por %p101, %p102
      %p105 = scmp.ne.s32.totalorder %s90, %s104
      %p106 = scmp.eq.s32.totalorder %s38, 0
      %p107 = por %p105, %p106
      %s109 = sadd.s32 %s108, 1
      %p112 = scmp.eq.s32.totalorder %s32, 1
      %p113 = scmp.ne.s32.totalorder %s108, %s110
      %p114 = scmp.eq.s32.totalorder %s32, 0
      %p115 = por %p113, %p114
      %p116 = scmp.ne.s32.totalorder %s108, %s110
      %p117 = scmp.eq.s32.totalorder %s37, 1
      %p118 = por %p116, %p117
      %p119 = scmp.ne.s32.totalorder %s110, %s111
      %p120 = scmp.eq.s32.totalorder %s37, 0
      %p121 = por %p119, %p120
      %p122 = scmp.ne.s32.totalorder %s110, %s111
      %p123 = scmp.eq.s32.totalorder %s38, 1
      %p124 = por %p122, %p123
      %p126 = scmp.ne.s32.totalorder %s111, %s125
      %p127 = scmp.eq.s32.totalorder %s38, 0
      %p128 = por %p126, %p127
      %s130 = sadd.s32 %s129, 1
      %p133 = scmp.eq.s32.totalorder %s32, 1
      %p134 = scmp.ne.s32.totalorder %s129, %s131
      %p135 = scmp.eq.s32.totalorder %s32, 0
      %p136 = por %p134, %p135
      %p137 = scmp.ne.s32.totalorder %s129, %s131
      %p138 = scmp.eq.s32.totalorder %s37, 1
      %p139 = por %p137, %p138
      %p140 = scmp.ne.s32.totalorder %s131, %s132
      %p141 = scmp.eq.s32.totalorder %s37, 0
      %p142 = por %p140, %p141
      %p143 = scmp.ne.s32.totalorder %s131, %s132
      %p144 = scmp.eq.s32.totalorder %s38, 1
      %p145 = por %p143, %p144
      %p147 = scmp.ne.s32.totalorder %s132, %s146
      %p148 = scmp.eq.s32.totalorder %s38, 0
      %p149 = por %p147, %p148
      %s151 = sadd.s32 %s150, 1
      %p154 = scmp.eq.s32.totalorder %s32, 1
      %p155 = scmp.ne.s32.totalorder %s150, %s152
      %p156 = scmp.eq.s32.totalorder %s32, 0
      %p157 = por %p155, %p156
      %p158 = scmp.ne.s32.totalorder %s150, %s152
      %p159 = scmp.eq.s32.totalorder %s37, 1
      %p160 = por %p158, %p159
      %p161 = scmp.ne.s32.totalorder %s152, %s153
      %p162 = scmp.eq.s32.totalorder %s37, 0
      %p163 = por %p161, %p162
      %p164 = scmp.ne.s32.totalorder %s152, %s153
      %p165 = scmp.eq.s32.totalorder %s38, 1
      %p166 = por %p164, %p165
      %p168 = scmp.ne.s32.totalorder %s153, %s167
      %p169 = scmp.eq.s32.totalorder %s38, 0
      %p170 = por %p168, %p169
      %s172 = sadd.s32 %s171, 1
      %p175 = scmp.eq.s32.totalorder %s32, 1
      %p176 = scmp.ne.s32.totalorder %s171, %s173
      %p177 = scmp.eq.s32.totalorder %s32, 0
      %p178 = por %p176, %p177
      %p179 = scmp.ne.s32.totalorder %s171, %s173
      %p180 = scmp.eq.s32.totalorder %s37, 1
      %p181 = por %p179, %p180
      %p182 = scmp.ne.s32.totalorder %s173, %s174
      %p183 = scmp.eq.s32.totalorder %s37, 0
      %p184 = por %p182, %p183
      %p185 = scmp.ne.s32.totalorder %s173, %s174
      %p186 = scmp.eq.s32.totalorder %s38, 1
      %p187 = por %p185, %p186
      %p189 = scmp.ne.s32.totalorder %s174, %s188
      %p190 = scmp.eq.s32.totalorder %s38, 0
      %p191 = por %p189, %p190
      %s193 = sadd.s32 %s192, 1
      %p196 = scmp.eq.s32.totalorder %s32, 1
      %p197 = scmp.ne.s32.totalorder %s192, %s194
      %p198 = scmp.eq.s32.totalorder %s32, 0
      %p199 = por %p197, %p198
      %p200 = scmp.ne.s32.totalorder %s192, %s194
      %p201 = scmp.eq.s32.totalorder %s37, 1
      %p202 = por %p200, %p201
      %p203 = scmp.ne.s32.totalorder %s194, %s195
      %p204 = scmp.eq.s32.totalorder %s37, 0
      %p205 = por %p203, %p204
      %p206 = scmp.ne.s32.totalorder %s194, %s195
      %p207 = scmp.eq.s32.totalorder %s38, 1
      %p208 = por %p206, %p207
      %p210 = scmp.ne.s32.totalorder %s195, %s209
      %p211 = scmp.eq.s32.totalorder %s38, 0
      %p212 = por %p210, %p211
      %s214 = sadd.s32 %s213, 1
      %p217 = scmp.eq.s32.totalorder %s32, 1
      %p218 = scmp.ne.s32.totalorder %s213, %s215
      %p219 = scmp.eq.s32.totalorder %s32, 0
      %p220 = por %p218, %p219
      %p221 = scmp.ne.s32.totalorder %s213, %s215
      %p222 = scmp.eq.s32.totalorder %s37, 1
      %p223 = por %p221, %p222
      %p224 = scmp.ne.s32.totalorder %s215, %s216
      %p225 = scmp.eq.s32.totalorder %s37, 0
      %p226 = por %p224, %p225
      %p227 = scmp.ne.s32.totalorder %s215, %s216
      %p228 = scmp.eq.s32.totalorder %s38, 1
      %p229 = por %p227, %p228
      %p231 = scmp.ne.s32.totalorder %s216, %s230
      %p232 = scmp.eq.s32.totalorder %s38, 0
      %p233 = por %p231, %p232
      %s235 = sadd.s32 %s234, 1
      %p238 = scmp.eq.s32.totalorder %s32, 1
      %p239 = scmp.ne.s32.totalorder %s234, %s236
      %p240 = scmp.eq.s32.totalorder %s32, 0
      %p241 = por %p239, %p240
      %p242 = scmp.ne.s32.totalorder %s234, %s236
      %p243 = scmp.eq.s32.totalorder %s37, 1
      %p244 = por %p242, %p243
      %p245 = scmp.ne.s32.totalorder %s236, %s237
      %p246 = scmp.eq.s32.totalorder %s37, 0
      %p247 = por %p245, %p246
      %p248 = scmp.ne.s32.totalorder %s236, %s237
      %p249 = scmp.eq.s32.totalorder %s38, 1
      %p250 = por %p248, %p249
      %p252 = scmp.ne.s32.totalorder %s237, %s251
      %p253 = scmp.eq.s32.totalorder %s38, 0
      %p254 = por %p252, %p253
      %s256 = sadd.s32 %s255, 1
      %p259 = scmp.eq.s32.totalorder %s32, 1
      %p260 = scmp.ne.s32.totalorder %s255, %s257
      %p261 = scmp.eq.s32.totalorder %s32, 0
      %p262 = por %p260, %p261
      %p263 = scmp.ne.s32.totalorder %s255, %s257
      %p264 = scmp.eq.s32.totalorder %s37, 1
      %p265 = por %p263, %p264
      %p266 = scmp.ne.s32.totalorder %s257, %s258
      %p267 = scmp.eq.s32.totalorder %s37, 0
      %p268 = por %p266, %p267
      %p269 = scmp.ne.s32.totalorder %s257, %s258
      %p270 = scmp.eq.s32.totalorder %s38, 1
      %p271 = por %p269, %p270
      %p273 = scmp.ne.s32.totalorder %s258, %s272
      %p274 = scmp.eq.s32.totalorder %s38, 0
      %p275 = por %p273, %p274
      %s277 = sadd.s32 %s276, 1
      %p280 = scmp.eq.s32.totalorder %s32, 1
      %p281 = scmp.ne.s32.totalorder %s276, %s278
      %p282 = scmp.eq.s32.totalorder %s32, 0
      %p283 = por %p281, %p282
      %p284 = scmp.ne.s32.totalorder %s276, %s278
      %p285 = scmp.eq.s32.totalorder %s37, 1
      %p286 = por %p284, %p285
      %p287 = scmp.ne.s32.totalorder %s278, %s279
      %p288 = scmp.eq.s32.totalorder %s37, 0
      %p289 = por %p287, %p288
      %p290 = scmp.ne.s32.totalorder %s278, %s279
      %p291 = scmp.eq.s32.totalorder %s38, 1
      %p292 = por %p290, %p291
      %p294 = scmp.ne.s32.totalorder %s279, %s293
      %p295 = scmp.eq.s32.totalorder %s38, 0
      %p296 = por %p294, %p295
      %s298 = sadd.s32 %s297, 1
      %p301 = scmp.eq.s32.totalorder %s32, 1
      %p302 = scmp.ne.s32.totalorder %s297, %s299
      %p303 = scmp.eq.s32.totalorder %s32, 0
      %p304 = por %p302, %p303
      %p305 = scmp.ne.s32.totalorder %s297, %s299
      %p306 = scmp.eq.s32.totalorder %s37, 1
      %p307 = por %p305, %p306
      %p308 = scmp.ne.s32.totalorder %s299, %s300
      %p309 = scmp.eq.s32.totalorder %s37, 0
      %p310 = por %p308, %p309
      %p311 = scmp.ne.s32.totalorder %s299, %s300
      %p312 = scmp.eq.s32.totalorder %s38, 1
      %p313 = por %p311, %p312
      %p315 = scmp.ne.s32.totalorder %s300, %s314
      %p316 = scmp.eq.s32.totalorder %s38, 0
      %p317 = por %p315, %p316
      %s319 = sadd.s32 %s318, 1
      %p322 = scmp.eq.s32.totalorder %s32, 1
      %p323 = scmp.ne.s32.totalorder %s318, %s320
      %p324 = scmp.eq.s32.totalorder %s32, 0
      %p325 = por %p323, %p324
      %p326 = scmp.ne.s32.totalorder %s318, %s320
      %p327 = scmp.eq.s32.totalorder %s37, 1
      %p328 = por %p326, %p327
      %p329 = scmp.ne.s32.totalorder %s320, %s321
      %p330 = scmp.eq.s32.totalorder %s37, 0
      %p331 = por %p329, %p330
      %p332 = scmp.ne.s32.totalorder %s320, %s321
      %p333 = scmp.eq.s32.totalorder %s38, 1
      %p334 = por %p332, %p333
      %p336 = scmp.ne.s32.totalorder %s321, %s335
      %p337 = scmp.eq.s32.totalorder %s38, 0
      %p338 = por %p336, %p337
      %s340 = sadd.s32 %s339, 1
      %p343 = scmp.eq.s32.totalorder %s32, 1
      %p344 = scmp.ne.s32.totalorder %s339, %s341
      %p345 = scmp.eq.s32.totalorder %s32, 0
      %p346 = por %p344, %p345
      %p347 = scmp.ne.s32.totalorder %s339, %s341
      %p348 = scmp.eq.s32.totalorder %s37, 1
      %p349 = por %p347, %p348
      %p350 = scmp.ne.s32.totalorder %s341, %s342
      %p351 = scmp.eq.s32.totalorder %s37, 0
      %p352 = por %p350, %p351
      %p353 = scmp.ne.s32.totalorder %s341, %s342
      %p354 = scmp.eq.s32.totalorder %s38, 1
      %p355 = por %p353, %p354
      %p357 = scmp.ne.s32.totalorder %s342, %s356
      %p358 = scmp.eq.s32.totalorder %s38, 0
      %p359 = por %p357, %p358
      %s361 = sadd.s32 %s360, 1
      %p364 = scmp.eq.s32.totalorder %s32, 1
      %p365 = scmp.ne.s32.totalorder %s360, %s362
      %p366 = scmp.eq.s32.totalorder %s32, 0
      %p367 = por %p365, %p366
      %p368 = scmp.ne.s32.totalorder %s360, %s362
      %p369 = scmp.eq.s32.totalorder %s37, 1
      %p370 = por %p368, %p369
      %p371 = scmp.ne.s32.totalorder %s362, %s363
      %p372 = scmp.eq.s32.totalorder %s37, 0
      %p373 = por %p371, %p372
      %p374 = scmp.ne.s32.totalorder %s362, %s363
      %p375 = scmp.eq.s32.totalorder %s38, 1
      %p376 = por %p374, %p375
      %p378 = scmp.ne.s32.totalorder %s363, %s377
      %p379 = scmp.eq.s32.totalorder %s38, 0
      %p380 = por %p378, %p379
      %s382 = sadd.s32 %s381, 1
      %p385 = scmp.eq.s32.totalorder %s32, 1
      %p386 = scmp.ne.s32.totalorder %s381, %s383
      %p387 = scmp.eq.s32.totalorder %s32, 0
      %p388 = por %p386, %p387
      %p389 = scmp.ne.s32.totalorder %s381, %s383
      %p390 = scmp.eq.s32.totalorder %s37, 1
      %p391 = por %p389, %p390
      %p392 = scmp.ne.s32.totalorder %s383, %s384
      %p393 = scmp.eq.s32.totalorder %s37, 0
      %p394 = por %p392, %p393
      %p395 = scmp.ne.s32.totalorder %s383, %s384
      %p396 = scmp.eq.s32.totalorder %s38, 1
      %p397 = por %p395, %p396
      %p399 = scmp.ne.s32.totalorder %s384, %s398
      %p400 = scmp.eq.s32.totalorder %s38, 0
      %p401 = por %p399, %p400
      %s403 = sadd.s32 %s402, 1
      %p406 = scmp.eq.s32.totalorder %s32, 1
      %p407 = scmp.ne.s32.totalorder %s402, %s404
      %p408 = scmp.eq.s32.totalorder %s32, 0
      %p409 = por %p407, %p408
      %p410 = scmp.ne.s32.totalorder %s402, %s404
      %p411 = scmp.eq.s32.totalorder %s37, 1
      %p412 = por %p410, %p411
      %p413 = scmp.ne.s32.totalorder %s404, %s405
      %p414 = scmp.eq.s32.totalorder %s37, 0
      %p415 = por %p413, %p414
      %p416 = scmp.ne.s32.totalorder %s404, %s405
      %p417 = scmp.eq.s32.totalorder %s38, 1
      %p418 = por %p416, %p417
      %p420 = scmp.ne.s32.totalorder %s405, %s419
      %p421 = scmp.eq.s32.totalorder %s38, 0
      %p422 = por %p420, %p421
      %s423 = ssub.s32 %s32, %s39
      %p424 = scmp.eq.s32.totalorder %s423, 0
      %s426 = sadd.s32 %s425, 1
      %s427 = scalar_select %p424, %s425, %s426
      %p430 = pneg %p424
      %p431 = scmp.eq.s32.totalorder %s32, 1
      %p432 = por %p430, %p431
      %p433 = scmp.ne.s32.totalorder %s425, %s428
      %p434 = scmp.eq.s32.totalorder %s32, 0
      %p435 = por %p433, %p434
      %p436 = scmp.ne.s32.totalorder %s425, %s428
      %p437 = scmp.eq.s32.totalorder %s37, 1
      %p438 = por %p436, %p437
      %p439 = scmp.ne.s32.totalorder %s428, %s429
      %p440 = scmp.eq.s32.totalorder %s37, 0
      %p441 = por %p439, %p440
      %p442 = scmp.ne.s32.totalorder %s428, %s429
      %p443 = scmp.eq.s32.totalorder %s38, 1
      %p444 = por %p442, %p443
      %p446 = scmp.ne.s32.totalorder %s429, %s445
      %p447 = scmp.eq.s32.totalorder %s38, 0
      %p448 = por %p446, %p447
      %s449 = ssub.s32 %s32, %s39
      %p450 = scmp.eq.s32.totalorder %s449, 0
      %s452 = sadd.s32 %s451, 1
      %s453 = scalar_select %p450, %s451, %s452
      %p456 = pneg %p450
      %p457 = scmp.eq.s32.totalorder %s32, 1
      %p458 = por %p456, %p457
      %p459 = scmp.ne.s32.totalorder %s451, %s454
      %p460 = scmp.eq.s32.totalorder %s32, 0
      %p461 = por %p459, %p460
      %p462 = scmp.ne.s32.totalorder %s451, %s454
      %p463 = scmp.eq.s32.totalorder %s37, 1
      %p464 = por %p462, %p463
      %p465 = scmp.ne.s32.totalorder %s454, %s455
      %p466 = scmp.eq.s32.totalorder %s37, 0
      %p467 = por %p465, %p466
      %p468 = scmp.ne.s32.totalorder %s454, %s455
      %p469 = scmp.eq.s32.totalorder %s38, 1
      %p470 = por %p468, %p469
      %p472 = scmp.ne.s32.totalorder %s455, %s471
      %p473 = scmp.eq.s32.totalorder %s38, 0
      %p474 = por %p472, %p473
      %p475 = scmp.le.s32.totalorder 1, %s32
      %p476 = scmp.lt.s32.totalorder %s32, 3
      %p477 = pnand %p475, %p476
      %p478 = pneg %p477
      // Predicated region
      $region9: #{cnnnet_forward.1} parent=5 // pred_check
        _
      $region10: #{cnnnet_forward.1} parent=5 // pred_check_branch
        %480 = sbr.rel (%p477) target = $region12
      $region11: #{cnnnet_forward.1} parent=5 // pred_region
        %s481 = ssub.s32 %s32, 1
        // Predicated region
        $region13: #{cnnnet_forward.1} parent=11 // pred_check
          %p482 = pneg %p79
        $region14: #{cnnnet_forward.1} parent=11 // pred_check_branch
          %484 = sbr.rel (%p482) target = $region16
        $region15: #{cnnnet_forward.1} parent=11 // pred_region
          _
        $region16: #{cnnnet_forward.1} parent=11 // pred_fallthru
          _
        // Predicated region
        $region17: #{cnnnet_forward.1} parent=11 // pred_check
          %p485 = pneg %p100
        $region18: #{cnnnet_forward.1} parent=11 // pred_check_branch
          %487 = sbr.rel (%p485) target = $region20
        $region19: #{cnnnet_forward.1} parent=11 // pred_region
          _
        $region20: #{cnnnet_forward.1} parent=11 // pred_fallthru
          _
        // Predicated region
        $region21: #{cnnnet_forward.1} parent=11 // pred_check
          %p488 = pneg %p121
        $region22: #{cnnnet_forward.1} parent=11 // pred_check_branch
          %490 = sbr.rel (%p488) target = $region24
        $region23: #{cnnnet_forward.1} parent=11 // pred_region
          _
        $region24: #{cnnnet_forward.1} parent=11 // pred_fallthru
          _
        // Predicated region
        $region25: #{cnnnet_forward.1} parent=11 // pred_check
          %p491 = pneg %p142
        $region26: #{cnnnet_forward.1} parent=11 // pred_check_branch
          %493 = sbr.rel (%p491) target = $region28
        $region27: #{cnnnet_forward.1} parent=11 // pred_region
          _
        $region28: #{cnnnet_forward.1} parent=11 // pred_fallthru
          _
        // Predicated region
        $region29: #{cnnnet_forward.1} parent=11 // pred_check
          %p494 = pneg %p163
        $region30: #{cnnnet_forward.1} parent=11 // pred_check_branch
          %496 = sbr.rel (%p494) target = $region32
        $region31: #{cnnnet_forward.1} parent=11 // pred_region
          _
        $region32: #{cnnnet_forward.1} parent=11 // pred_fallthru
          _
        // Predicated region
        $region33: #{cnnnet_forward.1} parent=11 // pred_check
          %p497 = pneg %p184
        $region34: #{cnnnet_forward.1} parent=11 // pred_check_branch
          %499 = sbr.rel (%p497) target = $region36
        $region35: #{cnnnet_forward.1} parent=11 // pred_region
          _
        $region36: #{cnnnet_forward.1} parent=11 // pred_fallthru
          _
        // Predicated region
        $region37: #{cnnnet_forward.1} parent=11 // pred_check
          %p500 = pneg %p205
        $region38: #{cnnnet_forward.1} parent=11 // pred_check_branch
          %502 = sbr.rel (%p500) target = $region40
        $region39: #{cnnnet_forward.1} parent=11 // pred_region
          _
        $region40: #{cnnnet_forward.1} parent=11 // pred_fallthru
          _
        // Predicated region
        $region41: #{cnnnet_forward.1} parent=11 // pred_check
          %p503 = pneg %p226
        $region42: #{cnnnet_forward.1} parent=11 // pred_check_branch
          %505 = sbr.rel (%p503) target = $region44
        $region43: #{cnnnet_forward.1} parent=11 // pred_region
          _
        $region44: #{cnnnet_forward.1} parent=11 // pred_fallthru
          _
        // Predicated region
        $region45: #{cnnnet_forward.1} parent=11 // pred_check
          %p506 = pneg %p247
        $region46: #{cnnnet_forward.1} parent=11 // pred_check_branch
          %508 = sbr.rel (%p506) target = $region48
        $region47: #{cnnnet_forward.1} parent=11 // pred_region
          _
        $region48: #{cnnnet_forward.1} parent=11 // pred_fallthru
          _
        // Predicated region
        $region49: #{cnnnet_forward.1} parent=11 // pred_check
          %p509 = pneg %p268
        $region50: #{cnnnet_forward.1} parent=11 // pred_check_branch
          %511 = sbr.rel (%p509) target = $region52
        $region51: #{cnnnet_forward.1} parent=11 // pred_region
          _
        $region52: #{cnnnet_forward.1} parent=11 // pred_fallthru
          _
        // Predicated region
        $region53: #{cnnnet_forward.1} parent=11 // pred_check
          %p512 = pneg %p289
        $region54: #{cnnnet_forward.1} parent=11 // pred_check_branch
          %514 = sbr.rel (%p512) target = $region56
        $region55: #{cnnnet_forward.1} parent=11 // pred_region
          _
        $region56: #{cnnnet_forward.1} parent=11 // pred_fallthru
          _
        // Predicated region
        $region57: #{cnnnet_forward.1} parent=11 // pred_check
          %p515 = pneg %p310
        $region58: #{cnnnet_forward.1} parent=11 // pred_check_branch
          %517 = sbr.rel (%p515) target = $region60
        $region59: #{cnnnet_forward.1} parent=11 // pred_region
          _
        $region60: #{cnnnet_forward.1} parent=11 // pred_fallthru
          _
        // Predicated region
        $region61: #{cnnnet_forward.1} parent=11 // pred_check
          %p518 = pneg %p331
        $region62: #{cnnnet_forward.1} parent=11 // pred_check_branch
          %520 = sbr.rel (%p518) target = $region64
        $region63: #{cnnnet_forward.1} parent=11 // pred_region
          _
        $region64: #{cnnnet_forward.1} parent=11 // pred_fallthru
          _
        // Predicated region
        $region65: #{cnnnet_forward.1} parent=11 // pred_check
          %p521 = pneg %p352
        $region66: #{cnnnet_forward.1} parent=11 // pred_check_branch
          %523 = sbr.rel (%p521) target = $region68
        $region67: #{cnnnet_forward.1} parent=11 // pred_region
          _
        $region68: #{cnnnet_forward.1} parent=11 // pred_fallthru
          _
        // Predicated region
        $region69: #{cnnnet_forward.1} parent=11 // pred_check
          %p524 = pneg %p373
        $region70: #{cnnnet_forward.1} parent=11 // pred_check_branch
          %526 = sbr.rel (%p524) target = $region72
        $region71: #{cnnnet_forward.1} parent=11 // pred_region
          _
        $region72: #{cnnnet_forward.1} parent=11 // pred_fallthru
          _
        // Predicated region
        $region73: #{cnnnet_forward.1} parent=11 // pred_check
          %p527 = pneg %p394
        $region74: #{cnnnet_forward.1} parent=11 // pred_check_branch
          %529 = sbr.rel (%p527) target = $region76
        $region75: #{cnnnet_forward.1} parent=11 // pred_region
          _
        $region76: #{cnnnet_forward.1} parent=11 // pred_fallthru
          _
        // Predicated region
        $region77: #{cnnnet_forward.1} parent=11 // pred_check
          %p530 = pneg %p415
        $region78: #{cnnnet_forward.1} parent=11 // pred_check_branch
          %532 = sbr.rel (%p530) target = $region80
        $region79: #{cnnnet_forward.1} parent=11 // pred_region
          _
        $region80: #{cnnnet_forward.1} parent=11 // pred_fallthru
          _
      $region12: #{cnnnet_forward.1} parent=5 // pred_fallthru
        _
      %p533 = scmp.lt.s32.totalorder %s32, 2
      // Predicated region
      $region81: #{cnnnet_forward.1} parent=5 // pred_check
        %p534 = pneg %p533
      $region82: #{cnnnet_forward.1} parent=5 // pred_check_branch
        %536 = sbr.rel (%p534) target = $region84
      $region83: #{cnnnet_forward.1} parent=5 // pred_region
        // Predicated region
        $region85: #{cnnnet_forward.1} parent=83 // pred_check
          %p537 = pneg %p52
        $region86: #{cnnnet_forward.1} parent=83 // pred_check_branch
          %539 = sbr.rel (%p537) target = $region88
        $region87: #{cnnnet_forward.1} parent=83 // pred_region
          %p540 = scmp.lt.s32.totalorder %s32, 1
          %s541 = scalar_select %p540, %s32, 1
          %s542 = smul.addr %s541, 3
          %s543 = smul.addr %s542, 8
          %s544 = scalar_lea.vmem %s0, %s543
        $region88: #{cnnnet_forward.1} parent=83 // pred_fallthru
          _
      $region84: #{cnnnet_forward.1} parent=5 // pred_fallthru
        _
      %p545 = scmp.le.s32.totalorder 1, %s32
      %p546 = scmp.lt.s32.totalorder %s32, 3
      %p547 = pnand %p545, %p546
      %p548 = pneg %p547
      // Predicated region
      $region89: #{cnnnet_forward.1} parent=5 // pred_check
        _
      $region90: #{cnnnet_forward.1} parent=5 // pred_check_branch
        %550 = sbr.rel (%p547) target = $region92
      $region91: #{cnnnet_forward.1} parent=5 // pred_region
        %s551 = ssub.s32 %s32, 1
        %p552 = scmp.lt.s32.totalorder %s37, 1
        %s553 = scalar_select %p552, %s37, 1
        %s554 = smul.addr %s553, 3
        %s555 = smul.addr %s554, 8
        %s556 = scalar_lea.vmem %s0, %s555
        %p557 = pneg %p58
        %p558 = pneg %p55
        %p559 = pneg %p79
        %p560 = pneg %p76
        %p561 = pneg %p100
        %p562 = pneg %p97
        %p563 = pneg %p121
        %p564 = pneg %p118
        %p565 = pneg %p142
        %p566 = pneg %p139
        %p567 = pneg %p163
        %p568 = pneg %p160
        %p569 = pneg %p184
        %p570 = pneg %p181
        %p571 = pneg %p205
        %p572 = pneg %p202
        %p573 = pneg %p226
        %p574 = pneg %p223
        %p575 = pneg %p247
        %p576 = pneg %p244
        %p577 = pneg %p268
        %p578 = pneg %p265
        %p579 = pneg %p289
        %p580 = pneg %p286
        %p581 = pneg %p310
        %p582 = pneg %p307
        %p583 = pneg %p331
        %p584 = pneg %p328
        %p585 = pneg %p352
        %p586 = pneg %p349
        %p587 = pneg %p373
        %p588 = pneg %p370
        %p589 = pneg %p394
        %p590 = pneg %p391
        %p591 = pneg %p415
        %p592 = pneg %p412
        %p593 = pneg %p441
        %p594 = pneg %p438
        %s595 = sand.u32 %s428, 1
        %s596 = scalar_lea.sflag [#allocation3], %s595
        %s597 = sand.u32 %s428, 1
        %s598 = scalar_lea.vmem [#allocation2], %s597
        %p599 = pneg %p467
        %p600 = pneg %p464
        %s601 = sand.u32 %s454, 1
        %s602 = scalar_lea.sflag [#allocation5], %s601
        %s603 = sand.u32 %s454, 1
        %s604 = scalar_lea.vmem [#allocation4], %s603
        %p605 = scmp.lt.s32.totalorder %s37, 1
        %s606 = scalar_select %p605, %s37, 1
        %s607 = smul.addr %s606, 3
        %s608 = smul.addr %s607, 8
        %s609 = scalar_lea.vmem %s0, %s608
        %v610 = vld [vmem:[%s609] sm:$0xff]
        %v611 = vld [vmem:[%s609 + $0x8] sm:$0xff]
        %v612 = vld [vmem:[%s609 + $0x10] sm:$0x3]
        %v613 = vld [vmem:[%s2] sm:$0x1]
        %v614 = vld [vmem:[%s1] sm:$0xff]
        %v615 = vld [vmem:[%s1 + $0x8] sm:$0xff]
        %v616 = vld [vmem:[%s1 + $0x10] sm:$0xff]
        %v617 = vld [vmem:[%s1 + $0x18] sm:$0xff]
        %v618 = vld [vmem:[%s1 + $0x20] sm:$0xff]
        %v619 = vld [vmem:[%s1 + $0x28] sm:$0xff]
        %v620 = vld [vmem:[%s1 + $0x30] sm:$0x3f]
        %vm621 = vcmask 441344
        %v623 = vsel %vm621, %v610, 0
        %v626 = vsel %vm621, %v611, 0
        %vm628 = vcmask 1045504
        %v630 = vsel %vm628, %v620, 0
        %632 = vmatprep.subr.mxu0 0.0
        %633 = vmatpush1.msra.mxu0 0.0
        %634 = vmatprep.subr.mxu0 0.0
        %635 = vmatpush1.msra.mxu0 0.0
        %636 = vmatprep.subr.mxu0 0.0
        %637 = vmatpush1.msra.mxu0 0.0
        %638 = vmatprep.subr.mxu0 0.0
        %639 = vmatpush1.msra.mxu0 0.0
        %640 = vmatprep.subr.mxu0 0.0
        %641 = vmatpush1.msra.mxu0 0.0
        %642 = vmatprep.subr.mxu0 0.0
        %643 = vmatpush1.msra.mxu0 0.0
        %644 = vmatprep.subr.mxu0 0.0
        %645 = vmatpush1.msra.mxu0 0.0
        %646 = vmatprep.subr.mxu0 0.0
        %647 = vmatpush1.msra.mxu0 0.0
        %648 = vmatprep.subr.mxu0 0.0
        %649 = vmatpush1.msra.mxu0 0.0
        %650 = vmatprep.subr.mxu0 0.0
        %651 = vmatpush1.msra.mxu0 %v630
        %652 = vmatprep.subr.mxu0 0.0
        %653 = vmatpush1.msra.mxu0 %v619
        %654 = vmatprep.subr.mxu0 0.0
        %655 = vmatpush1.msra.mxu0 %v618
        %656 = vmatprep.subr.mxu0 0.0
        %657 = vmatpush1.msra.mxu0 %v617
        %658 = vmatprep.subr.mxu0 0.0
        %659 = vmatpush1.msra.mxu0 %v616
        %660 = vmatprep.subr.mxu0 0.0
        %661 = vmatpush1.msra.mxu0 %v615
        %662 = vmatprep.subr.mxu0 0.0
        %663 = vmatpush1.msra.mxu0 %v614
        %664 = vmatprep.subr.mxu0 0.0
        %665 = vmatpush2.msra.mxu0 0.0
        %666 = vmatprep.subr.mxu0 0.0
        %667 = vmatpush2.msra.mxu0 0.0
        %668 = vmatprep.subr.mxu0 0.0
        %669 = vmatpush2.msra.mxu0 0.0
        %670 = vmatprep.subr.mxu0 0.0
        %671 = vmatpush2.msra.mxu0 0.0
        %672 = vmatprep.subr.mxu0 0.0
        %673 = vmatpush2.msra.mxu0 0.0
        %674 = vmatprep.subr.mxu0 0.0
        %675 = vmatpush2.msra.mxu0 0.0
        %676 = vmatprep.subr.mxu0 0.0
        %677 = vmatpush2.msra.mxu0 0.0
        %678 = vmatprep.subr.mxu0 0.0
        %679 = vmatpush2.msra.mxu0 0.0
        %680 = vmatprep.subr.mxu0 0.0
        %681 = vmatpush2.msra.mxu0 0.0
        %682 = vmatprep.subr.mxu0 0.0
        %683 = vmatpush2.msra.mxu0 0.0
        %684 = vmatprep.subr.mxu0 0.0
        %685 = vmatpush2.msra.mxu0 0.0
        %686 = vmatprep.subr.mxu0 0.0
        %687 = vmatpush2.msra.mxu0 0.0
        %688 = vmatprep.subr.mxu0 0.0
        %689 = vmatpush2.msra.mxu0 0.0
        %690 = vmatprep.subr.mxu0 0.0
        %691 = vmatpush2.msra.mxu0 0.0
        %692 = vmatprep.subr.mxu0 0.0
        %693 = vmatpush2.msra.mxu0 0.0
        %694 = vmatprep.subr.mxu0 0.0
        %695 = vmatpush2.msra.mxu0 0.0
        %696 = vmatprep.mubr.f32.mxu0 0.0
        %697 = vmatmul.mubr.f32.gmra.mxu0 %v623
        %v698 = vpop.f32.mrf.mxu0
        %v699 = vadd.f32 0.0, %v698
        %v700 = vpop.f32.mrf.mxu0
        %701 = vmatprep.mubr.f32.mxu0 0.0
        %702 = vmatmul.mubr.f32.gmra.mxu0 %v626
        %v703 = vpop.f32.mrf.mxu0
        %v704 = vadd.f32 0.0, %v703
        %v705 = vpop.f32.mrf.mxu0
        %706 = vdwg.mxu0
        %v708 = vlaneseq
        %v709 = vshrl.u32 %v708, 7
        %v710 = vsub.s32 0, %v709
        %v711 = vrot.slane %v613, %v710
        %v713 = vadd.f32 %v711, %v699
        %v714 = vadd.f32 %v711, %v704
        %s715 = scalar_lea.vmem %s1, 56
        %v716 = vld [vmem:[%s715] sm:$0xff]
        %v717 = vld [vmem:[%s715 + $0x8] sm:$0xff]
        %v718 = vld [vmem:[%s715 + $0x10] sm:$0xff]
        %v719 = vld [vmem:[%s715 + $0x18] sm:$0xff]
        %v720 = vld [vmem:[%s715 + $0x20] sm:$0xff]
        %v721 = vld [vmem:[%s715 + $0x28] sm:$0xff]
        %v722 = vld [vmem:[%s715 + $0x30] sm:$0x3f]
        %vm724 = vcmask 1046528
        %v725 = vrot.slane %v610, 1
        %v726 = vrot.slane %v611, 1
        %v727 = vsel %vm724, %v725, %v726
        %v728 = vrot.slane %v612, 1
        %v729 = vsel %vm724, %v726, %v728
        %v730 = vsel %vm621, %v727, 0
        %v732 = vsel %vm621, %v729, 0
        %v735 = vsel %vm628, %v722, 0
        %737 = vmatprep.subr.mxu0 0.0
        %738 = vmatpush1.msra.mxu0 0.0
        %739 = vmatprep.subr.mxu0 0.0
        %740 = vmatpush1.msra.mxu0 0.0
        %741 = vmatprep.subr.mxu0 0.0
        %742 = vmatpush1.msra.mxu0 0.0
        %743 = vmatprep.subr.mxu0 0.0
        %744 = vmatpush1.msra.mxu0 0.0
        %745 = vmatprep.subr.mxu0 0.0
        %746 = vmatpush1.msra.mxu0 0.0
        %747 = vmatprep.subr.mxu0 0.0
        %748 = vmatpush1.msra.mxu0 0.0
        %749 = vmatprep.subr.mxu0 0.0
        %750 = vmatpush1.msra.mxu0 0.0
        %751 = vmatprep.subr.mxu0 0.0
        %752 = vmatpush1.msra.mxu0 0.0
        %753 = vmatprep.subr.mxu0 0.0
        %754 = vmatpush1.msra.mxu0 0.0
        %755 = vmatprep.subr.mxu0 0.0
        %756 = vmatpush1.msra.mxu0 %v735
        %757 = vmatprep.subr.mxu0 0.0
        %758 = vmatpush1.msra.mxu0 %v721
        %759 = vmatprep.subr.mxu0 0.0
        %760 = vmatpush1.msra.mxu0 %v720
        %761 = vmatprep.subr.mxu0 0.0
        %762 = vmatpush1.msra.mxu0 %v719
        %763 = vmatprep.subr.mxu0 0.0
        %764 = vmatpush1.msra.mxu0 %v718
        %765 = vmatprep.subr.mxu0 0.0
        %766 = vmatpush1.msra.mxu0 %v717
        %767 = vmatprep.subr.mxu0 0.0
        %768 = vmatpush1.msra.mxu0 %v716
        %769 = vmatprep.subr.mxu0 0.0
        %770 = vmatpush2.msra.mxu0 0.0
        %771 = vmatprep.subr.mxu0 0.0
        %772 = vmatpush2.msra.mxu0 0.0
        %773 = vmatprep.subr.mxu0 0.0
        %774 = vmatpush2.msra.mxu0 0.0
        %775 = vmatprep.subr.mxu0 0.0
        %776 = vmatpush2.msra.mxu0 0.0
        %777 = vmatprep.subr.mxu0 0.0
        %778 = vmatpush2.msra.mxu0 0.0
        %779 = vmatprep.subr.mxu0 0.0
        %780 = vmatpush2.msra.mxu0 0.0
        %781 = vmatprep.subr.mxu0 0.0
        %782 = vmatpush2.msra.mxu0 0.0
        %783 = vmatprep.subr.mxu0 0.0
        %784 = vmatpush2.msra.mxu0 0.0
        %785 = vmatprep.subr.mxu0 0.0
        %786 = vmatpush2.msra.mxu0 0.0
        %787 = vmatprep.subr.mxu0 0.0
        %788 = vmatpush2.msra.mxu0 0.0
        %789 = vmatprep.subr.mxu0 0.0
        %790 = vmatpush2.msra.mxu0 0.0
        %791 = vmatprep.subr.mxu0 0.0
        %792 = vmatpush2.msra.mxu0 0.0
        %793 = vmatprep.subr.mxu0 0.0
        %794 = vmatpush2.msra.mxu0 0.0
        %795 = vmatprep.subr.mxu0 0.0
        %796 = vmatpush2.msra.mxu0 0.0
        %797 = vmatprep.subr.mxu0 0.0
        %798 = vmatpush2.msra.mxu0 0.0
        %799 = vmatprep.subr.mxu0 0.0
        %800 = vmatpush2.msra.mxu0 0.0
        %801 = vmatprep.mubr.f32.mxu0 0.0
        %802 = vmatmul.mubr.f32.gmra.mxu0 %v730
        %v803 = vpop.f32.mrf.mxu0
        %v804 = vadd.f32 0.0, %v803
        %v805 = vpop.f32.mrf.mxu0
        %806 = vmatprep.mubr.f32.mxu0 0.0
        %807 = vmatmul.mubr.f32.gmra.mxu0 %v732
        %v808 = vpop.f32.mrf.mxu0
        %v809 = vadd.f32 0.0, %v808
        %v810 = vpop.f32.mrf.mxu0
        %811 = vdwg.mxu0
        %v812 = vadd.f32 %v713, %v804
        %v813 = vadd.f32 %v714, %v809
        %s814 = scalar_lea.vmem %s1, 112
        %v815 = vld [vmem:[%s814] sm:$0xff]
        %v816 = vld [vmem:[%s814 + $0x8] sm:$0xff]
        %v817 = vld [vmem:[%s814 + $0x10] sm:$0xff]
        %v818 = vld [vmem:[%s814 + $0x18] sm:$0xff]
        %v819 = vld [vmem:[%s814 + $0x20] sm:$0xff]
        %v820 = vld [vmem:[%s814 + $0x28] sm:$0xff]
        %v821 = vld [vmem:[%s814 + $0x30] sm:$0x3f]
        %v822 = vrot.slane %v610, 2
        %v823 = vrot.slane %v611, 2
        %v824 = vsel %vm628, %v822, %v823
        %v825 = vrot.slane %v612, 2
        %v826 = vsel %vm628, %v823, %v825
        %v827 = vsel %vm621, %v824, 0
        %v829 = vsel %vm621, %v826, 0
        %v832 = vsel %vm628, %v821, 0
        %834 = vmatprep.subr.mxu0 0.0
        %835 = vmatpush1.msra.mxu0 0.0
        %836 = vmatprep.subr.mxu0 0.0
        %837 = vmatpush1.msra.mxu0 0.0
        %838 = vmatprep.subr.mxu0 0.0
        %839 = vmatpush1.msra.mxu0 0.0
        %840 = vmatprep.subr.mxu0 0.0
        %841 = vmatpush1.msra.mxu0 0.0
        %842 = vmatprep.subr.mxu0 0.0
        %843 = vmatpush1.msra.mxu0 0.0
        %844 = vmatprep.subr.mxu0 0.0
        %845 = vmatpush1.msra.mxu0 0.0
        %846 = vmatprep.subr.mxu0 0.0
        %847 = vmatpush1.msra.mxu0 0.0
        %848 = vmatprep.subr.mxu0 0.0
        %849 = vmatpush1.msra.mxu0 0.0
        %850 = vmatprep.subr.mxu0 0.0
        %851 = vmatpush1.msra.mxu0 0.0
        %852 = vmatprep.subr.mxu0 0.0
        %853 = vmatpush1.msra.mxu0 %v832
        %854 = vmatprep.subr.mxu0 0.0
        %855 = vmatpush1.msra.mxu0 %v820
        %856 = vmatprep.subr.mxu0 0.0
        %857 = vmatpush1.msra.mxu0 %v819
        %858 = vmatprep.subr.mxu0 0.0
        %859 = vmatpush1.msra.mxu0 %v818
        %860 = vmatprep.subr.mxu0 0.0
        %861 = vmatpush1.msra.mxu0 %v817
        %862 = vmatprep.subr.mxu0 0.0
        %863 = vmatpush1.msra.mxu0 %v816
        %864 = vmatprep.subr.mxu0 0.0
        %865 = vmatpush1.msra.mxu0 %v815
        %866 = vmatprep.subr.mxu0 0.0
        %867 = vmatpush2.msra.mxu0 0.0
        %868 = vmatprep.subr.mxu0 0.0
        %869 = vmatpush2.msra.mxu0 0.0
        %870 = vmatprep.subr.mxu0 0.0
        %871 = vmatpush2.msra.mxu0 0.0
        %872 = vmatprep.subr.mxu0 0.0
        %873 = vmatpush2.msra.mxu0 0.0
        %874 = vmatprep.subr.mxu0 0.0
        %875 = vmatpush2.msra.mxu0 0.0
        %876 = vmatprep.subr.mxu0 0.0
        %877 = vmatpush2.msra.mxu0 0.0
        %878 = vmatprep.subr.mxu0 0.0
        %879 = vmatpush2.msra.mxu0 0.0
        %880 = vmatprep.subr.mxu0 0.0
        %881 = vmatpush2.msra.mxu0 0.0
        %882 = vmatprep.subr.mxu0 0.0
        %883 = vmatpush2.msra.mxu0 0.0
        %884 = vmatprep.subr.mxu0 0.0
        %885 = vmatpush2.msra.mxu0 0.0
        %886 = vmatprep.subr.mxu0 0.0
        %887 = vmatpush2.msra.mxu0 0.0
        %888 = vmatprep.subr.mxu0 0.0
        %889 = vmatpush2.msra.mxu0 0.0
        %890 = vmatprep.subr.mxu0 0.0
        %891 = vmatpush2.msra.mxu0 0.0
        %892 = vmatprep.subr.mxu0 0.0
        %893 = vmatpush2.msra.mxu0 0.0
        %894 = vmatprep.subr.mxu0 0.0
        %895 = vmatpush2.msra.mxu0 0.0
        %896 = vmatprep.subr.mxu0 0.0
        %897 = vmatpush2.msra.mxu0 0.0
        %898 = vmatprep.mubr.f32.mxu0 0.0
        %899 = vmatmul.mubr.f32.gmra.mxu0 %v827
        %v900 = vpop.f32.mrf.mxu0
        %v901 = vadd.f32 0.0, %v900
        %v902 = vpop.f32.mrf.mxu0
        %903 = vmatprep.mubr.f32.mxu0 0.0
        %904 = vmatmul.mubr.f32.gmra.mxu0 %v829
        %v905 = vpop.f32.mrf.mxu0
        %v906 = vadd.f32 0.0, %v905
        %v907 = vpop.f32.mrf.mxu0
        %908 = vdwg.mxu0
        %v909 = vadd.f32 %v812, %v901
        %v910 = vadd.f32 %v813, %v906
        %v911 = vmax.f32 %v909, 0.0
        %v912 = vmax.f32 %v910, 0.0
        %v915 = vrot.slane %v911, 1
        %v916 = vrot.slane %v912, 1
        %v917 = vsel %vm724, %v915, %v916
        %v920 = vmax.f32 %v911, %v917
        %v921 = vmax.f32 %v912, %v916
        %v922 = vld [vmem:[%s4] sm:$0xff]
        %v923 = vld [vmem:[%s4 + $0x8] sm:$0xff]
        %v924 = vld [vmem:[%s4 + $0x10] sm:$0xff]
        %v925 = vld [vmem:[%s4 + $0x18] sm:$0xff]
        %v926 = vld [vmem:[%s4 + $0x20] sm:$0xff]
        %v927 = vld [vmem:[%s4 + $0x28] sm:$0xff]
        %v928 = vld [vmem:[%s4 + $0x30] sm:$0xff]
        %v929 = vld [vmem:[%s4 + $0x38] sm:$0xff]
        %v930 = vld [vmem:[%s4 + $0x40] sm:$0xff]
        %v931 = vld [vmem:[%s4 + $0x48] sm:$0xff]
        %v932 = vld [vmem:[%s4 + $0x50] sm:$0xff]
        %v933 = vld [vmem:[%s4 + $0x58] sm:$0xff]
        %v934 = vld [vmem:[%s4 + $0x60] sm:$0xff]
        %v935 = vld [vmem:[%s4 + $0x68] sm:$0xff]
        %v936 = vld [vmem:[%s4 + $0x70] sm:$0xff]
        %v937 = vld [vmem:[%s4 + $0x78] sm:$0xff]
        %938 = vmatprep.subr.mxu0 0.0
        %939 = vmatpush1.msra.mxu0 %v937
        %940 = vmatprep.subr.mxu0 0.0
        %941 = vmatpush1.msra.mxu0 %v936
        %942 = vmatprep.subr.mxu0 0.0
        %943 = vmatpush1.msra.mxu0 %v935
        %944 = vmatprep.subr.mxu0 0.0
        %945 = vmatpush1.msra.mxu0 %v934
        %946 = vmatprep.subr.mxu0 0.0
        %947 = vmatpush1.msra.mxu0 %v933
        %948 = vmatprep.subr.mxu0 0.0
        %949 = vmatpush1.msra.mxu0 %v932
        %950 = vmatprep.subr.mxu0 0.0
        %951 = vmatpush1.msra.mxu0 %v931
        %952 = vmatprep.subr.mxu0 0.0
        %953 = vmatpush1.msra.mxu0 %v930
        %954 = vmatprep.subr.mxu0 0.0
        %955 = vmatpush1.msra.mxu0 %v929
        %956 = vmatprep.subr.mxu0 0.0
        %957 = vmatpush1.msra.mxu0 %v928
        %958 = vmatprep.subr.mxu0 0.0
        %959 = vmatpush1.msra.mxu0 %v927
        %960 = vmatprep.subr.mxu0 0.0
        %961 = vmatpush1.msra.mxu0 %v926
        %962 = vmatprep.subr.mxu0 0.0
        %963 = vmatpush1.msra.mxu0 %v925
        %964 = vmatprep.subr.mxu0 0.0
        %965 = vmatpush1.msra.mxu0 %v924
        %966 = vmatprep.subr.mxu0 0.0
        %967 = vmatpush1.msra.mxu0 %v923
        %968 = vmatprep.subr.mxu0 0.0
        %969 = vmatpush1.msra.mxu0 %v922
        %970 = vmatprep.subr.mxu0 0.0
        %971 = vmatpush2.msra.mxu0 0.0
        %972 = vmatprep.subr.mxu0 0.0
        %973 = vmatpush2.msra.mxu0 0.0
        %974 = vmatprep.subr.mxu0 0.0
        %975 = vmatpush2.msra.mxu0 0.0
        %976 = vmatprep.subr.mxu0 0.0
        %977 = vmatpush2.msra.mxu0 0.0
        %978 = vmatprep.subr.mxu0 0.0
        %979 = vmatpush2.msra.mxu0 0.0
        %980 = vmatprep.subr.mxu0 0.0
        %981 = vmatpush2.msra.mxu0 0.0
        %982 = vmatprep.subr.mxu0 0.0
        %983 = vmatpush2.msra.mxu0 0.0
        %984 = vmatprep.subr.mxu0 0.0
        %985 = vmatpush2.msra.mxu0 0.0
        %986 = vmatprep.subr.mxu0 0.0
        %987 = vmatpush2.msra.mxu0 0.0
        %988 = vmatprep.subr.mxu0 0.0
        %989 = vmatpush2.msra.mxu0 0.0
        %990 = vmatprep.subr.mxu0 0.0
        %991 = vmatpush2.msra.mxu0 0.0
        %992 = vmatprep.subr.mxu0 0.0
        %993 = vmatpush2.msra.mxu0 0.0
        %994 = vmatprep.subr.mxu0 0.0
        %995 = vmatpush2.msra.mxu0 0.0
        %996 = vmatprep.subr.mxu0 0.0
        %997 = vmatpush2.msra.mxu0 0.0
        %998 = vmatprep.subr.mxu0 0.0
        %999 = vmatpush2.msra.mxu0 0.0
        %1000 = vmatprep.subr.mxu0 0.0
        %1001 = vmatpush2.msra.mxu0 0.0
        %1002 = vmatprep.mubr.f32.mxu0 0.0
        %1003 = vmatmul.mubr.f32.gmra.mxu0 %v920
        %v1004 = vpop.f32.mrf.mxu0
        %v1005 = vadd.f32 0.0, %v1004
        %v1006 = vpop.f32.mrf.mxu0
        %1007 = vmatprep.mubr.f32.mxu0 0.0
        %1008 = vmatmul.mubr.f32.gmra.mxu0 %v921
        %v1009 = vpop.f32.mrf.mxu0
        %v1010 = vadd.f32 0.0, %v1009
        %v1011 = vpop.f32.mrf.mxu0
        %1012 = vdwg.mxu0
        %v1013 = vld [vmem:[%s5] sm:$0xff]
        %v1014 = vld [vmem:[%s5 + $0x8] sm:$0xff]
        %v1015 = vld [vmem:[%s5 + $0x10] sm:$0xff]
        %v1016 = vld [vmem:[%s5 + $0x18] sm:$0xff]
        %v1017 = vld [vmem:[%s5 + $0x20] sm:$0xff]
        %v1018 = vld [vmem:[%s5 + $0x28] sm:$0xff]
        %v1019 = vld [vmem:[%s5 + $0x30] sm:$0xff]
        %v1020 = vld [vmem:[%s5 + $0x38] sm:$0xff]
        %v1021 = vld [vmem:[%s5 + $0x40] sm:$0xff]
        %v1022 = vld [vmem:[%s5 + $0x48] sm:$0xff]
        %v1023 = vld [vmem:[%s5 + $0x50] sm:$0xff]
        %v1024 = vld [vmem:[%s5 + $0x58] sm:$0xff]
        %v1025 = vld [vmem:[%s5 + $0x60] sm:$0xff]
        %v1026 = vld [vmem:[%s5 + $0x68] sm:$0xff]
        %v1027 = vld [vmem:[%s5 + $0x70] sm:$0xff]
        %v1028 = vld [vmem:[%s5 + $0x78] sm:$0xff]
        %1029 = vmatprep.subr.mxu0 0.0
        %1030 = vmatpush1.msra.mxu0 %v1028
        %1031 = vmatprep.subr.mxu0 0.0
        %1032 = vmatpush1.msra.mxu0 %v1027
        %1033 = vmatprep.subr.mxu0 0.0
        %1034 = vmatpush1.msra.mxu0 %v1026
        %1035 = vmatprep.subr.mxu0 0.0
        %1036 = vmatpush1.msra.mxu0 %v1025
        %1037 = vmatprep.subr.mxu0 0.0
        %1038 = vmatpush1.msra.mxu0 %v1024
        %1039 = vmatprep.subr.mxu0 0.0
        %1040 = vmatpush1.msra.mxu0 %v1023
        %1041 = vmatprep.subr.mxu0 0.0
        %1042 = vmatpush1.msra.mxu0 %v1022
        %1043 = vmatprep.subr.mxu0 0.0
        %1044 = vmatpush1.msra.mxu0 %v1021
        %1045 = vmatprep.subr.mxu0 0.0
        %1046 = vmatpush1.msra.mxu0 %v1020
        %1047 = vmatprep.subr.mxu0 0.0
        %1048 = vmatpush1.msra.mxu0 %v1019
        %1049 = vmatprep.subr.mxu0 0.0
        %1050 = vmatpush1.msra.mxu0 %v1018
        %1051 = vmatprep.subr.mxu0 0.0
        %1052 = vmatpush1.msra.mxu0 %v1017
        %1053 = vmatprep.subr.mxu0 0.0
        %1054 = vmatpush1.msra.mxu0 %v1016
        %1055 = vmatprep.subr.mxu0 0.0
        %1056 = vmatpush1.msra.mxu0 %v1015
        %1057 = vmatprep.subr.mxu0 0.0
        %1058 = vmatpush1.msra.mxu0 %v1014
        %1059 = vmatprep.subr.mxu0 0.0
        %1060 = vmatpush1.msra.mxu0 %v1013
        %1061 = vmatprep.subr.mxu0 0.0
        %1062 = vmatpush2.msra.mxu0 0.0
        %1063 = vmatprep.subr.mxu0 0.0
        %1064 = vmatpush2.msra.mxu0 0.0
        %1065 = vmatprep.subr.mxu0 0.0
        %1066 = vmatpush2.msra.mxu0 0.0
        %1067 = vmatprep.subr.mxu0 0.0
        %1068 = vmatpush2.msra.mxu0 0.0
        %1069 = vmatprep.subr.mxu0 0.0
        %1070 = vmatpush2.msra.mxu0 0.0
        %1071 = vmatprep.subr.mxu0 0.0
        %1072 = vmatpush2.msra.mxu0 0.0
        %1073 = vmatprep.subr.mxu0 0.0
        %1074 = vmatpush2.msra.mxu0 0.0
        %1075 = vmatprep.subr.mxu0 0.0
        %1076 = vmatpush2.msra.mxu0 0.0
        %1077 = vmatprep.subr.mxu0 0.0
        %1078 = vmatpush2.msra.mxu0 0.0
        %1079 = vmatprep.subr.mxu0 0.0
        %1080 = vmatpush2.msra.mxu0 0.0
        %1081 = vmatprep.subr.mxu0 0.0
        %1082 = vmatpush2.msra.mxu0 0.0
        %1083 = vmatprep.subr.mxu0 0.0
        %1084 = vmatpush2.msra.mxu0 0.0
        %1085 = vmatprep.subr.mxu0 0.0
        %1086 = vmatpush2.msra.mxu0 0.0
        %1087 = vmatprep.subr.mxu0 0.0
        %1088 = vmatpush2.msra.mxu0 0.0
        %1089 = vmatprep.subr.mxu0 0.0
        %1090 = vmatpush2.msra.mxu0 0.0
        %1091 = vmatprep.subr.mxu0 0.0
        %1092 = vmatpush2.msra.mxu0 0.0
        %1093 = vmatprep.mubr.f32.mxu0 0.0
        %1094 = vmatmul.mubr.f32.gmra.mxu0 %v920
        %v1095 = vpop.f32.mrf.mxu0
        %v1096 = vadd.f32 0.0, %v1095
        %v1097 = vpop.f32.mrf.mxu0
        %1098 = vmatprep.mubr.f32.mxu0 0.0
        %1099 = vmatmul.mubr.f32.gmra.mxu0 %v921
        %v1100 = vpop.f32.mrf.mxu0
        %v1101 = vadd.f32 0.0, %v1100
        %v1102 = vpop.f32.mrf.mxu0
        %1103 = vdwg.mxu0
        %v1104 = vmax.f32 %v1005, %v1096
        %v1105 = vmax.f32 %v1010, %v1101
        %v1106 = vld [vmem:[%s3] sm:$0xff]
        %v1107 = vld [vmem:[%s3 + $0x8] sm:$0x3]
        %vm1108 = vcmask 121856
        %v1110 = vsel %vm1108, %v1106, 0
        %v1113 = vsel %vm1108, %v1107, 0
        %v1116 = vsel %vm724, %v1105, 0
        %1118 = vmatprep.subr.mxu0 0.0
        %1119 = vmatpush1.msra.mxu0 0.0
        %1120 = vmatprep.subr.mxu0 0.0
        %1121 = vmatpush1.msra.mxu0 0.0
        %1122 = vmatprep.subr.mxu0 0.0
        %1123 = vmatpush1.msra.mxu0 0.0
        %1124 = vmatprep.subr.mxu0 0.0
        %1125 = vmatpush1.msra.mxu0 0.0
        %1126 = vmatprep.subr.mxu0 0.0
        %1127 = vmatpush1.msra.mxu0 0.0
        %1128 = vmatprep.subr.mxu0 0.0
        %1129 = vmatpush1.msra.mxu0 0.0
        %1130 = vmatprep.subr.mxu0 0.0
        %1131 = vmatpush1.msra.mxu0 0.0
        %1132 = vmatprep.subr.mxu0 0.0
        %1133 = vmatpush1.msra.mxu0 0.0
        %1134 = vmatprep.subr.mxu0 0.0
        %1135 = vmatpush1.msra.mxu0 0.0
        %1136 = vmatprep.subr.mxu0 0.0
        %1137 = vmatpush1.msra.mxu0 0.0
        %1138 = vmatprep.subr.mxu0 0.0
        %1139 = vmatpush1.msra.mxu0 0.0
        %1140 = vmatprep.subr.mxu0 0.0
        %1141 = vmatpush1.msra.mxu0 0.0
        %1142 = vmatprep.subr.mxu0 0.0
        %1143 = vmatpush1.msra.mxu0 0.0
        %1144 = vmatprep.subr.mxu0 0.0
        %1145 = vmatpush1.msra.mxu0 0.0
        %1146 = vmatprep.subr.mxu0 0.0
        %1147 = vmatpush1.msra.mxu0 %v1116
        %1148 = vmatprep.subr.mxu0 0.0
        %1149 = vmatpush1.msra.mxu0 %v1104
        %1150 = vmatprep.subr.mxu0 0.0
        %1151 = vmatpush2.msra.mxu0 0.0
        %1152 = vmatprep.subr.mxu0 0.0
        %1153 = vmatpush2.msra.mxu0 0.0
        %1154 = vmatprep.subr.mxu0 0.0
        %1155 = vmatpush2.msra.mxu0 0.0
        %1156 = vmatprep.subr.mxu0 0.0
        %1157 = vmatpush2.msra.mxu0 0.0
        %1158 = vmatprep.subr.mxu0 0.0
        %1159 = vmatpush2.msra.mxu0 0.0
        %1160 = vmatprep.subr.mxu0 0.0
        %1161 = vmatpush2.msra.mxu0 0.0
        %1162 = vmatprep.subr.mxu0 0.0
        %1163 = vmatpush2.msra.mxu0 0.0
        %1164 = vmatprep.subr.mxu0 0.0
        %1165 = vmatpush2.msra.mxu0 0.0
        %1166 = vmatprep.subr.mxu0 0.0
        %1167 = vmatpush2.msra.mxu0 0.0
        %1168 = vmatprep.subr.mxu0 0.0
        %1169 = vmatpush2.msra.mxu0 0.0
        %1170 = vmatprep.subr.mxu0 0.0
        %1171 = vmatpush2.msra.mxu0 0.0
        %1172 = vmatprep.subr.mxu0 0.0
        %1173 = vmatpush2.msra.mxu0 0.0
        %1174 = vmatprep.subr.mxu0 0.0
        %1175 = vmatpush2.msra.mxu0 0.0
        %1176 = vmatprep.subr.mxu0 0.0
        %1177 = vmatpush2.msra.mxu0 0.0
        %1178 = vmatprep.subr.mxu0 0.0
        %1179 = vmatpush2.msra.mxu0 0.0
        %1180 = vmatprep.subr.mxu0 0.0
        %1181 = vmatpush2.msra.mxu0 0.0
        %1182 = vmatprep.mubr.f32.mxu0 0.0
        %1183 = vmatmul.mubr.f32.gmra.mxu0 %v1110
        %v1184 = vpop.f32.mrf.mxu0
        %v1185 = vadd.f32 0.0, %v1184
        %v1186 = vpop.f32.mrf.mxu0
        %1187 = vmatprep.mubr.f32.mxu0 0.0
        %1188 = vmatmul.mubr.f32.gmra.mxu0 %v1113
        %v1189 = vpop.f32.mrf.mxu0
        %v1190 = vadd.f32 0.0, %v1189
        %v1191 = vpop.f32.mrf.mxu0
        %1192 = vdwg.mxu0
        %v1193 = vld [vmem:[%s7] sm:$0x1]
        %v1194 = vld [vmem:[%s6] sm:$0xff]
        %v1195 = vld [vmem:[%s6 + $0x8] sm:$0xff]
        %v1196 = vld [vmem:[%s6 + $0x10] sm:$0xff]
        %v1197 = vld [vmem:[%s6 + $0x18] sm:$0xff]
        %v1198 = vld [vmem:[%s6 + $0x20] sm:$0xff]
        %v1199 = vld [vmem:[%s6 + $0x28] sm:$0xff]
        %v1200 = vld [vmem:[%s6 + $0x30] sm:$0xff]
        %v1201 = vld [vmem:[%s6 + $0x38] sm:$0xff]
        %v1202 = vld [vmem:[%s6 + $0x40] sm:$0xff]
        %v1203 = vld [vmem:[%s6 + $0x48] sm:$0xff]
        %vm1204 = vcmask 654336
        %v1206 = vsel %vm1204, %v1185, 0
        %1208 = vmatprep.subr.mxu0 0.0
        %1209 = vmatpush1.msra.mxu0 0.0
        %1210 = vmatprep.subr.mxu0 0.0
        %1211 = vmatpush1.msra.mxu0 0.0
        %1212 = vmatprep.subr.mxu0 0.0
        %1213 = vmatpush1.msra.mxu0 0.0
        %1214 = vmatprep.subr.mxu0 0.0
        %1215 = vmatpush1.msra.mxu0 0.0
        %1216 = vmatprep.subr.mxu0 0.0
        %1217 = vmatpush1.msra.mxu0 0.0
        %1218 = vmatprep.subr.mxu0 0.0
        %1219 = vmatpush1.msra.mxu0 0.0
        %1220 = vmatprep.subr.mxu0 0.0
        %1221 = vmatpush1.msra.mxu0 %v1203
        %1222 = vmatprep.subr.mxu0 0.0
        %1223 = vmatpush1.msra.mxu0 %v1202
        %1224 = vmatprep.subr.mxu0 0.0
        %1225 = vmatpush1.msra.mxu0 %v1201
        %1226 = vmatprep.subr.mxu0 0.0
        %1227 = vmatpush1.msra.mxu0 %v1200
        %1228 = vmatprep.subr.mxu0 0.0
        %1229 = vmatpush1.msra.mxu0 %v1199
        %1230 = vmatprep.subr.mxu0 0.0
        %1231 = vmatpush1.msra.mxu0 %v1198
        %1232 = vmatprep.subr.mxu0 0.0
        %1233 = vmatpush1.msra.mxu0 %v1197
        %1234 = vmatprep.subr.mxu0 0.0
        %1235 = vmatpush1.msra.mxu0 %v1196
        %1236 = vmatprep.subr.mxu0 0.0
        %1237 = vmatpush1.msra.mxu0 %v1195
        %1238 = vmatprep.subr.mxu0 0.0
        %1239 = vmatpush1.msra.mxu0 %v1194
        %1240 = vmatprep.subr.mxu0 0.0
        %1241 = vmatpush2.msra.mxu0 0.0
        %1242 = vmatprep.subr.mxu0 0.0
        %1243 = vmatpush2.msra.mxu0 0.0
        %1244 = vmatprep.subr.mxu0 0.0
        %1245 = vmatpush2.msra.mxu0 0.0
        %1246 = vmatprep.subr.mxu0 0.0
        %1247 = vmatpush2.msra.mxu0 0.0
        %1248 = vmatprep.subr.mxu0 0.0
        %1249 = vmatpush2.msra.mxu0 0.0
        %1250 = vmatprep.subr.mxu0 0.0
        %1251 = vmatpush2.msra.mxu0 0.0
        %1252 = vmatprep.subr.mxu0 0.0
        %1253 = vmatpush2.msra.mxu0 0.0
        %1254 = vmatprep.subr.mxu0 0.0
        %1255 = vmatpush2.msra.mxu0 0.0
        %1256 = vmatprep.subr.mxu0 0.0
        %1257 = vmatpush2.msra.mxu0 0.0
        %1258 = vmatprep.subr.mxu0 0.0
        %1259 = vmatpush2.msra.mxu0 0.0
        %1260 = vmatprep.subr.mxu0 0.0
        %1261 = vmatpush2.msra.mxu0 0.0
        %1262 = vmatprep.subr.mxu0 0.0
        %1263 = vmatpush2.msra.mxu0 0.0
        %1264 = vmatprep.subr.mxu0 0.0
        %1265 = vmatpush2.msra.mxu0 0.0
        %1266 = vmatprep.subr.mxu0 0.0
        %1267 = vmatpush2.msra.mxu0 0.0
        %1268 = vmatprep.subr.mxu0 0.0
        %1269 = vmatpush2.msra.mxu0 0.0
        %1270 = vmatprep.subr.mxu0 0.0
        %1271 = vmatpush2.msra.mxu0 0.0
        %1272 = vmatprep.mubr.f32.mxu0 0.0
        %1273 = vmatmul.mubr.f32.gmra.mxu0 %v1206
        %v1274 = vpop.f32.mrf.mxu0
        %v1275 = vadd.f32 0.0, %v1274
        %v1276 = vpop.f32.mrf.mxu0
        %1277 = vdwg.mxu0
        %v1279 = vlaneseq
        %v1280 = vshrl.u32 %v1279, 7
        %v1281 = vsub.s32 0, %v1280
        %v1282 = vrot.slane %v1193, %v1281
        %v1284 = vadd.f32 %v1282, %v1275
        %s1285 = scalar_lea.vmem %s6, 80
        %v1286 = vld [vmem:[%s1285] sm:$0xff]
        %v1287 = vld [vmem:[%s1285 + $0x8] sm:$0xff]
        %v1288 = vld [vmem:[%s1285 + $0x10] sm:$0xff]
        %v1289 = vld [vmem:[%s1285 + $0x18] sm:$0xff]
        %v1290 = vld [vmem:[%s1285 + $0x20] sm:$0xff]
        %v1291 = vld [vmem:[%s1285 + $0x28] sm:$0xff]
        %v1292 = vld [vmem:[%s1285 + $0x30] sm:$0xff]
        %v1293 = vld [vmem:[%s1285 + $0x38] sm:$0xff]
        %v1294 = vld [vmem:[%s1285 + $0x40] sm:$0xff]
        %v1295 = vld [vmem:[%s1285 + $0x48] sm:$0xff]
        %v1297 = vrot.slane %v1185, 1
        %v1298 = vrot.slane %v1190, 1
        %v1299 = vsel %vm724, %v1297, %v1298
        %v1300 = vsel %vm1204, %v1299, 0
        %1302 = vmatprep.subr.mxu0 0.0
        %1303 = vmatpush1.msra.mxu0 0.0
        %1304 = vmatprep.subr.mxu0 0.0
        %1305 = vmatpush1.msra.mxu0 0.0
        %1306 = vmatprep.subr.mxu0 0.0
        %1307 = vmatpush1.msra.mxu0 0.0
        %1308 = vmatprep.subr.mxu0 0.0
        %1309 = vmatpush1.msra.mxu0 0.0
        %1310 = vmatprep.subr.mxu0 0.0
        %1311 = vmatpush1.msra.mxu0 0.0
        %1312 = vmatprep.subr.mxu0 0.0
        %1313 = vmatpush1.msra.mxu0 0.0
        %1314 = vmatprep.subr.mxu0 0.0
        %1315 = vmatpush1.msra.mxu0 %v1295
        %1316 = vmatprep.subr.mxu0 0.0
        %1317 = vmatpush1.msra.mxu0 %v1294
        %1318 = vmatprep.subr.mxu0 0.0
        %1319 = vmatpush1.msra.mxu0 %v1293
        %1320 = vmatprep.subr.mxu0 0.0
        %1321 = vmatpush1.msra.mxu0 %v1292
        %1322 = vmatprep.subr.mxu0 0.0
        %1323 = vmatpush1.msra.mxu0 %v1291
        %1324 = vmatprep.subr.mxu0 0.0
        %1325 = vmatpush1.msra.mxu0 %v1290
        %1326 = vmatprep.subr.mxu0 0.0
        %1327 = vmatpush1.msra.mxu0 %v1289
        %1328 = vmatprep.subr.mxu0 0.0
        %1329 = vmatpush1.msra.mxu0 %v1288
        %1330 = vmatprep.subr.mxu0 0.0
        %1331 = vmatpush1.msra.mxu0 %v1287
        %1332 = vmatprep.subr.mxu0 0.0
        %1333 = vmatpush1.msra.mxu0 %v1286
        %1334 = vmatprep.subr.mxu0 0.0
        %1335 = vmatpush2.msra.mxu0 0.0
        %1336 = vmatprep.subr.mxu0 0.0
        %1337 = vmatpush2.msra.mxu0 0.0
        %1338 = vmatprep.subr.mxu0 0.0
        %1339 = vmatpush2.msra.mxu0 0.0
        %1340 = vmatprep.subr.mxu0 0.0
        %1341 = vmatpush2.msra.mxu0 0.0
        %1342 = vmatprep.subr.mxu0 0.0
        %1343 = vmatpush2.msra.mxu0 0.0
        %1344 = vmatprep.subr.mxu0 0.0
        %1345 = vmatpush2.msra.mxu0 0.0
        %1346 = vmatprep.subr.mxu0 0.0
        %1347 = vmatpush2.msra.mxu0 0.0
        %1348 = vmatprep.subr.mxu0 0.0
        %1349 = vmatpush2.msra.mxu0 0.0
        %1350 = vmatprep.subr.mxu0 0.0
        %1351 = vmatpush2.msra.mxu0 0.0
        %1352 = vmatprep.subr.mxu0 0.0
        %1353 = vmatpush2.msra.mxu0 0.0
        %1354 = vmatprep.subr.mxu0 0.0
        %1355 = vmatpush2.msra.mxu0 0.0
        %1356 = vmatprep.subr.mxu0 0.0
        %1357 = vmatpush2.msra.mxu0 0.0
        %1358 = vmatprep.subr.mxu0 0.0
        %1359 = vmatpush2.msra.mxu0 0.0
        %1360 = vmatprep.subr.mxu0 0.0
        %1361 = vmatpush2.msra.mxu0 0.0
        %1362 = vmatprep.subr.mxu0 0.0
        %1363 = vmatpush2.msra.mxu0 0.0
        %1364 = vmatprep.subr.mxu0 0.0
        %1365 = vmatpush2.msra.mxu0 0.0
        %1366 = vmatprep.mubr.f32.mxu0 0.0
        %1367 = vmatmul.mubr.f32.gmra.mxu0 %v1300
        %v1368 = vpop.f32.mrf.mxu0
        %v1369 = vadd.f32 0.0, %v1368
        %v1370 = vpop.f32.mrf.mxu0
        %1371 = vdwg.mxu0
        %v1372 = vadd.f32 %v1284, %v1369
        %s1373 = scalar_lea.vmem %s6, 160
        %v1374 = vld [vmem:[%s1373] sm:$0xff]
        %v1375 = vld [vmem:[%s1373 + $0x8] sm:$0xff]
        %v1376 = vld [vmem:[%s1373 + $0x10] sm:$0xff]
        %v1377 = vld [vmem:[%s1373 + $0x18] sm:$0xff]
        %v1378 = vld [vmem:[%s1373 + $0x20] sm:$0xff]
        %v1379 = vld [vmem:[%s1373 + $0x28] sm:$0xff]
        %v1380 = vld [vmem:[%s1373 + $0x30] sm:$0xff]
        %v1381 = vld [vmem:[%s1373 + $0x38] sm:$0xff]
        %v1382 = vld [vmem:[%s1373 + $0x40] sm:$0xff]
        %v1383 = vld [vmem:[%s1373 + $0x48] sm:$0xff]
        %v1384 = vrot.slane %v1185, 2
        %v1385 = vrot.slane %v1190, 2
        %v1386 = vsel %vm628, %v1384, %v1385
        %v1387 = vsel %vm1204, %v1386, 0
        %1389 = vmatprep.subr.mxu0 0.0
        %1390 = vmatpush1.msra.mxu0 0.0
        %1391 = vmatprep.subr.mxu0 0.0
        %1392 = vmatpush1.msra.mxu0 0.0
        %1393 = vmatprep.subr.mxu0 0.0
        %1394 = vmatpush1.msra.mxu0 0.0
        %1395 = vmatprep.subr.mxu0 0.0
        %1396 = vmatpush1.msra.mxu0 0.0
        %1397 = vmatprep.subr.mxu0 0.0
        %1398 = vmatpush1.msra.mxu0 0.0
        %1399 = vmatprep.subr.mxu0 0.0
        %1400 = vmatpush1.msra.mxu0 0.0
        %1401 = vmatprep.subr.mxu0 0.0
        %1402 = vmatpush1.msra.mxu0 %v1383
        %1403 = vmatprep.subr.mxu0 0.0
        %1404 = vmatpush1.msra.mxu0 %v1382
        %1405 = vmatprep.subr.mxu0 0.0
        %1406 = vmatpush1.msra.mxu0 %v1381
        %1407 = vmatprep.subr.mxu0 0.0
        %1408 = vmatpush1.msra.mxu0 %v1380
        %1409 = vmatprep.subr.mxu0 0.0
        %1410 = vmatpush1.msra.mxu0 %v1379
        %1411 = vmatprep.subr.mxu0 0.0
        %1412 = vmatpush1.msra.mxu0 %v1378
        %1413 = vmatprep.subr.mxu0 0.0
        %1414 = vmatpush1.msra.mxu0 %v1377
        %1415 = vmatprep.subr.mxu0 0.0
        %1416 = vmatpush1.msra.mxu0 %v1376
        %1417 = vmatprep.subr.mxu0 0.0
        %1418 = vmatpush1.msra.mxu0 %v1375
        %1419 = vmatprep.subr.mxu0 0.0
        %1420 = vmatpush1.msra.mxu0 %v1374
        %1421 = vmatprep.subr.mxu0 0.0
        %1422 = vmatpush2.msra.mxu0 0.0
        %1423 = vmatprep.subr.mxu0 0.0
        %1424 = vmatpush2.msra.mxu0 0.0
        %1425 = vmatprep.subr.mxu0 0.0
        %1426 = vmatpush2.msra.mxu0 0.0
        %1427 = vmatprep.subr.mxu0 0.0
        %1428 = vmatpush2.msra.mxu0 0.0
        %1429 = vmatprep.subr.mxu0 0.0
        %1430 = vmatpush2.msra.mxu0 0.0
        %1431 = vmatprep.subr.mxu0 0.0
        %1432 = vmatpush2.msra.mxu0 0.0
        %1433 = vmatprep.subr.mxu0 0.0
        %1434 = vmatpush2.msra.mxu0 0.0
        %1435 = vmatprep.subr.mxu0 0.0
        %1436 = vmatpush2.msra.mxu0 0.0
        %1437 = vmatprep.subr.mxu0 0.0
        %1438 = vmatpush2.msra.mxu0 0.0
        %1439 = vmatprep.subr.mxu0 0.0
        %1440 = vmatpush2.msra.mxu0 0.0
        %1441 = vmatprep.subr.mxu0 0.0
        %1442 = vmatpush2.msra.mxu0 0.0
        %1443 = vmatprep.subr.mxu0 0.0
        %1444 = vmatpush2.msra.mxu0 0.0
        %1445 = vmatprep.subr.mxu0 0.0
        %1446 = vmatpush2.msra.mxu0 0.0
        %1447 = vmatprep.subr.mxu0 0.0
        %1448 = vmatpush2.msra.mxu0 0.0
        %1449 = vmatprep.subr.mxu0 0.0
        %1450 = vmatpush2.msra.mxu0 0.0
        %1451 = vmatprep.subr.mxu0 0.0
        %1452 = vmatpush2.msra.mxu0 0.0
        %1453 = vmatprep.mubr.f32.mxu0 0.0
        %1454 = vmatmul.mubr.f32.gmra.mxu0 %v1387
        %v1455 = vpop.f32.mrf.mxu0
        %v1456 = vadd.f32 0.0, %v1455
        %v1457 = vpop.f32.mrf.mxu0
        %1458 = vdwg.mxu0
        %v1459 = vadd.f32 %v1372, %v1456
        %v1460 = vmax.f32 %v1459, 0.0
        %v1462 = vrot.slane %v1460, 1
        %v1464 = vmax.f32 %v1460, %v1462
        %v1465 = vld [vmem:[%s8] sm:$0xff]
        %v1466 = vld [vmem:[%s8 + $0x8] sm:$0xff]
        %v1467 = vld [vmem:[%s8 + $0x10] sm:$0xff]
        %v1468 = vld [vmem:[%s8 + $0x18] sm:$0xff]
        %v1469 = vld [vmem:[%s8 + $0x20] sm:$0xff]
        %v1470 = vld [vmem:[%s8 + $0x28] sm:$0xff]
        %v1471 = vld [vmem:[%s8 + $0x30] sm:$0xff]
        %v1472 = vld [vmem:[%s8 + $0x38] sm:$0xff]
        %v1473 = vld [vmem:[%s8 + $0x40] sm:$0xff]
        %v1474 = vld [vmem:[%s8 + $0x48] sm:$0xff]
        %v1475 = vld [vmem:[%s8 + $0x50] sm:$0xff]
        %v1476 = vld [vmem:[%s8 + $0x58] sm:$0xff]
        %v1477 = vld [vmem:[%s8 + $0x60] sm:$0xff]
        %v1478 = vld [vmem:[%s8 + $0x68] sm:$0xff]
        %v1479 = vld [vmem:[%s8 + $0x70] sm:$0xff]
        %v1480 = vld [vmem:[%s8 + $0x78] sm:$0xff]
        %1481 = vmatprep.subr.mxu0 0.0
        %1482 = vmatpush1.msra.mxu0 %v1480
        %1483 = vmatprep.subr.mxu0 0.0
        %1484 = vmatpush1.msra.mxu0 %v1479
        %1485 = vmatprep.subr.mxu0 0.0
        %1486 = vmatpush1.msra.mxu0 %v1478
        %1487 = vmatprep.subr.mxu0 0.0
        %1488 = vmatpush1.msra.mxu0 %v1477
        %1489 = vmatprep.subr.mxu0 0.0
        %1490 = vmatpush1.msra.mxu0 %v1476
        %1491 = vmatprep.subr.mxu0 0.0
        %1492 = vmatpush1.msra.mxu0 %v1475
        %1493 = vmatprep.subr.mxu0 0.0
        %1494 = vmatpush1.msra.mxu0 %v1474
        %1495 = vmatprep.subr.mxu0 0.0
        %1496 = vmatpush1.msra.mxu0 %v1473
        %1497 = vmatprep.subr.mxu0 0.0
        %1498 = vmatpush1.msra.mxu0 %v1472
        %1499 = vmatprep.subr.mxu0 0.0
        %1500 = vmatpush1.msra.mxu0 %v1471
        %1501 = vmatprep.subr.mxu0 0.0
        %1502 = vmatpush1.msra.mxu0 %v1470
        %1503 = vmatprep.subr.mxu0 0.0
        %1504 = vmatpush1.msra.mxu0 %v1469
        %1505 = vmatprep.subr.mxu0 0.0
        %1506 = vmatpush1.msra.mxu0 %v1468
        %1507 = vmatprep.subr.mxu0 0.0
        %1508 = vmatpush1.msra.mxu0 %v1467
        %1509 = vmatprep.subr.mxu0 0.0
        %1510 = vmatpush1.msra.mxu0 %v1466
        %1511 = vmatprep.subr.mxu0 0.0
        %1512 = vmatpush1.msra.mxu0 %v1465
        %1513 = vmatprep.subr.mxu0 0.0
        %1514 = vmatpush2.msra.mxu0 0.0
        %1515 = vmatprep.subr.mxu0 0.0
        %1516 = vmatpush2.msra.mxu0 0.0
        %1517 = vmatprep.subr.mxu0 0.0
        %1518 = vmatpush2.msra.mxu0 0.0
        %1519 = vmatprep.subr.mxu0 0.0
        %1520 = vmatpush2.msra.mxu0 0.0
        %1521 = vmatprep.subr.mxu0 0.0
        %1522 = vmatpush2.msra.mxu0 0.0
        %1523 = vmatprep.subr.mxu0 0.0
        %1524 = vmatpush2.msra.mxu0 0.0
        %1525 = vmatprep.subr.mxu0 0.0
        %1526 = vmatpush2.msra.mxu0 0.0
        %1527 = vmatprep.subr.mxu0 0.0
        %1528 = vmatpush2.msra.mxu0 0.0
        %1529 = vmatprep.subr.mxu0 0.0
        %1530 = vmatpush2.msra.mxu0 0.0
        %1531 = vmatprep.subr.mxu0 0.0
        %1532 = vmatpush2.msra.mxu0 0.0
        %1533 = vmatprep.subr.mxu0 0.0
        %1534 = vmatpush2.msra.mxu0 0.0
        %1535 = vmatprep.subr.mxu0 0.0
        %1536 = vmatpush2.msra.mxu0 0.0
        %1537 = vmatprep.subr.mxu0 0.0
        %1538 = vmatpush2.msra.mxu0 0.0
        %1539 = vmatprep.subr.mxu0 0.0
        %1540 = vmatpush2.msra.mxu0 0.0
        %1541 = vmatprep.subr.mxu0 0.0
        %1542 = vmatpush2.msra.mxu0 0.0
        %1543 = vmatprep.subr.mxu0 0.0
        %1544 = vmatpush2.msra.mxu0 0.0
        %1545 = vmatprep.mubr.f32.mxu0 0.0
        %1546 = vmatmul.mubr.f32.gmra.mxu0 %v1464
        %v1547 = vpop.f32.mrf.mxu0
        %v1548 = vadd.f32 0.0, %v1547
        %v1549 = vpop.f32.mrf.mxu0
        %1550 = vdwg.mxu0
        %v1551 = vld [vmem:[%s9] sm:$0xff]
        %v1552 = vld [vmem:[%s9 + $0x8] sm:$0xff]
        %v1553 = vld [vmem:[%s9 + $0x10] sm:$0xff]
        %v1554 = vld [vmem:[%s9 + $0x18] sm:$0xff]
        %v1555 = vld [vmem:[%s9 + $0x20] sm:$0xff]
        %v1556 = vld [vmem:[%s9 + $0x28] sm:$0xff]
        %v1557 = vld [vmem:[%s9 + $0x30] sm:$0xff]
        %v1558 = vld [vmem:[%s9 + $0x38] sm:$0xff]
        %v1559 = vld [vmem:[%s9 + $0x40] sm:$0xff]
        %v1560 = vld [vmem:[%s9 + $0x48] sm:$0xff]
        %v1561 = vld [vmem:[%s9 + $0x50] sm:$0xff]
        %v1562 = vld [vmem:[%s9 + $0x58] sm:$0xff]
        %v1563 = vld [vmem:[%s9 + $0x60] sm:$0xff]
        %v1564 = vld [vmem:[%s9 + $0x68] sm:$0xff]
        %v1565 = vld [vmem:[%s9 + $0x70] sm:$0xff]
        %v1566 = vld [vmem:[%s9 + $0x78] sm:$0xff]
        %1567 = vmatprep.subr.mxu0 0.0
        %1568 = vmatpush1.msra.mxu0 %v1566
        %1569 = vmatprep.subr.mxu0 0.0
        %1570 = vmatpush1.msra.mxu0 %v1565
        %1571 = vmatprep.subr.mxu0 0.0
        %1572 = vmatpush1.msra.mxu0 %v1564
        %1573 = vmatprep.subr.mxu0 0.0
        %1574 = vmatpush1.msra.mxu0 %v1563
        %1575 = vmatprep.subr.mxu0 0.0
        %1576 = vmatpush1.msra.mxu0 %v1562
        %1577 = vmatprep.subr.mxu0 0.0
        %1578 = vmatpush1.msra.mxu0 %v1561
        %1579 = vmatprep.subr.mxu0 0.0
        %1580 = vmatpush1.msra.mxu0 %v1560
        %1581 = vmatprep.subr.mxu0 0.0
        %1582 = vmatpush1.msra.mxu0 %v1559
        %1583 = vmatprep.subr.mxu0 0.0
        %1584 = vmatpush1.msra.mxu0 %v1558
        %1585 = vmatprep.subr.mxu0 0.0
        %1586 = vmatpush1.msra.mxu0 %v1557
        %1587 = vmatprep.subr.mxu0 0.0
        %1588 = vmatpush1.msra.mxu0 %v1556
        %1589 = vmatprep.subr.mxu0 0.0
        %1590 = vmatpush1.msra.mxu0 %v1555
        %1591 = vmatprep.subr.mxu0 0.0
        %1592 = vmatpush1.msra.mxu0 %v1554
        %1593 = vmatprep.subr.mxu0 0.0
        %1594 = vmatpush1.msra.mxu0 %v1553
        %1595 = vmatprep.subr.mxu0 0.0
        %1596 = vmatpush1.msra.mxu0 %v1552
        %1597 = vmatprep.subr.mxu0 0.0
        %1598 = vmatpush1.msra.mxu0 %v1551
        %1599 = vmatprep.subr.mxu0 0.0
        %1600 = vmatpush2.msra.mxu0 0.0
        %1601 = vmatprep.subr.mxu0 0.0
        %1602 = vmatpush2.msra.mxu0 0.0
        %1603 = vmatprep.subr.mxu0 0.0
        %1604 = vmatpush2.msra.mxu0 0.0
        %1605 = vmatprep.subr.mxu0 0.0
        %1606 = vmatpush2.msra.mxu0 0.0
        %1607 = vmatprep.subr.mxu0 0.0
        %1608 = vmatpush2.msra.mxu0 0.0
        %1609 = vmatprep.subr.mxu0 0.0
        %1610 = vmatpush2.msra.mxu0 0.0
        %1611 = vmatprep.subr.mxu0 0.0
        %1612 = vmatpush2.msra.mxu0 0.0
        %1613 = vmatprep.subr.mxu0 0.0
        %1614 = vmatpush2.msra.mxu0 0.0
        %1615 = vmatprep.subr.mxu0 0.0
        %1616 = vmatpush2.msra.mxu0 0.0
        %1617 = vmatprep.subr.mxu0 0.0
        %1618 = vmatpush2.msra.mxu0 0.0
        %1619 = vmatprep.subr.mxu0 0.0
        %1620 = vmatpush2.msra.mxu0 0.0
        %1621 = vmatprep.subr.mxu0 0.0
        %1622 = vmatpush2.msra.mxu0 0.0
        %1623 = vmatprep.subr.mxu0 0.0
        %1624 = vmatpush2.msra.mxu0 0.0
        %1625 = vmatprep.subr.mxu0 0.0
        %1626 = vmatpush2.msra.mxu0 0.0
        %1627 = vmatprep.subr.mxu0 0.0
        %1628 = vmatpush2.msra.mxu0 0.0
        %1629 = vmatprep.subr.mxu0 0.0
        %1630 = vmatpush2.msra.mxu0 0.0
        %1631 = vmatprep.mubr.f32.mxu0 0.0
        %1632 = vmatmul.mubr.f32.gmra.mxu0 %v1464
        %v1633 = vpop.f32.mrf.mxu0
        %v1634 = vadd.f32 0.0, %v1633
        %v1635 = vpop.f32.mrf.mxu0
        %1636 = vdwg.mxu0
        %v1637 = vmax.f32 %v1548, %v1634
        %v1638 = vld [vmem:[%s11] sm:$0x1]
        %v1639 = vld [vmem:[%s10] sm:$0xff]
        %v1640 = vld [vmem:[%s10 + $0x8] sm:$0xff]
        %v1641 = vld [vmem:[%s10 + $0x10] sm:$0xff]
        %v1642 = vld [vmem:[%s10 + $0x18] sm:$0xff]
        %v1643 = vld [vmem:[%s10 + $0x20] sm:$0xff]
        %v1644 = vld [vmem:[%s10 + $0x28] sm:$0xff]
        %v1645 = vld [vmem:[%s10 + $0x30] sm:$0xff]
        %v1646 = vld [vmem:[%s10 + $0x38] sm:$0xff]
        %vm1647 = vcmask 523264
        %v1649 = vsel %vm1647, %v1637, 0
        %1651 = vmatprep.subr.mxu0 0.0
        %1652 = vmatpush1.msra.mxu0 0.0
        %1653 = vmatprep.subr.mxu0 0.0
        %1654 = vmatpush1.msra.mxu0 0.0
        %1655 = vmatprep.subr.mxu0 0.0
        %1656 = vmatpush1.msra.mxu0 0.0
        %1657 = vmatprep.subr.mxu0 0.0
        %1658 = vmatpush1.msra.mxu0 0.0
        %1659 = vmatprep.subr.mxu0 0.0
        %1660 = vmatpush1.msra.mxu0 0.0
        %1661 = vmatprep.subr.mxu0 0.0
        %1662 = vmatpush1.msra.mxu0 0.0
        %1663 = vmatprep.subr.mxu0 0.0
        %1664 = vmatpush1.msra.mxu0 0.0
        %1665 = vmatprep.subr.mxu0 0.0
        %1666 = vmatpush1.msra.mxu0 0.0
        %1667 = vmatprep.subr.mxu0 0.0
        %1668 = vmatpush1.msra.mxu0 %v1646
        %1669 = vmatprep.subr.mxu0 0.0
        %1670 = vmatpush1.msra.mxu0 %v1645
        %1671 = vmatprep.subr.mxu0 0.0
        %1672 = vmatpush1.msra.mxu0 %v1644
        %1673 = vmatprep.subr.mxu0 0.0
        %1674 = vmatpush1.msra.mxu0 %v1643
        %1675 = vmatprep.subr.mxu0 0.0
        %1676 = vmatpush1.msra.mxu0 %v1642
        %1677 = vmatprep.subr.mxu0 0.0
        %1678 = vmatpush1.msra.mxu0 %v1641
        %1679 = vmatprep.subr.mxu0 0.0
        %1680 = vmatpush1.msra.mxu0 %v1640
        %1681 = vmatprep.subr.mxu0 0.0
        %1682 = vmatpush1.msra.mxu0 %v1639
        %1683 = vmatprep.subr.mxu0 0.0
        %1684 = vmatpush2.msra.mxu0 0.0
        %1685 = vmatprep.subr.mxu0 0.0
        %1686 = vmatpush2.msra.mxu0 0.0
        %1687 = vmatprep.subr.mxu0 0.0
        %1688 = vmatpush2.msra.mxu0 0.0
        %1689 = vmatprep.subr.mxu0 0.0
        %1690 = vmatpush2.msra.mxu0 0.0
        %1691 = vmatprep.subr.mxu0 0.0
        %1692 = vmatpush2.msra.mxu0 0.0
        %1693 = vmatprep.subr.mxu0 0.0
        %1694 = vmatpush2.msra.mxu0 0.0
        %1695 = vmatprep.subr.mxu0 0.0
        %1696 = vmatpush2.msra.mxu0 0.0
        %1697 = vmatprep.subr.mxu0 0.0
        %1698 = vmatpush2.msra.mxu0 0.0
        %1699 = vmatprep.subr.mxu0 0.0
        %1700 = vmatpush2.msra.mxu0 0.0
        %1701 = vmatprep.subr.mxu0 0.0
        %1702 = vmatpush2.msra.mxu0 0.0
        %1703 = vmatprep.subr.mxu0 0.0
        %1704 = vmatpush2.msra.mxu0 0.0
        %1705 = vmatprep.subr.mxu0 0.0
        %1706 = vmatpush2.msra.mxu0 0.0
        %1707 = vmatprep.subr.mxu0 0.0
        %1708 = vmatpush2.msra.mxu0 0.0
        %1709 = vmatprep.subr.mxu0 0.0
        %1710 = vmatpush2.msra.mxu0 0.0
        %1711 = vmatprep.subr.mxu0 0.0
        %1712 = vmatpush2.msra.mxu0 0.0
        %1713 = vmatprep.subr.mxu0 0.0
        %1714 = vmatpush2.msra.mxu0 0.0
        %1715 = vmatprep.mubr.f32.mxu0 0.0
        %1716 = vmatmul.mubr.f32.gmra.mxu0 %v1649
        %v1717 = vpop.f32.mrf.mxu0
        %v1718 = vadd.f32 0.0, %v1717
        %v1719 = vpop.f32.mrf.mxu0
        %1720 = vdwg.mxu0
        %v1721 = vadd.f32 %v1638, %v1718
        %s1722 = scalar_lea.vmem %s10, 64
        %v1723 = vld [vmem:[%s1722] sm:$0xff]
        %v1724 = vld [vmem:[%s1722 + $0x8] sm:$0xff]
        %v1725 = vld [vmem:[%s1722 + $0x10] sm:$0xff]
        %v1726 = vld [vmem:[%s1722 + $0x18] sm:$0xff]
        %v1727 = vld [vmem:[%s1722 + $0x20] sm:$0xff]
        %v1728 = vld [vmem:[%s1722 + $0x28] sm:$0xff]
        %v1729 = vld [vmem:[%s1722 + $0x30] sm:$0xff]
        %v1730 = vld [vmem:[%s1722 + $0x38] sm:$0xff]
        %v1731 = vrot.slane %v1637, 2
        %v1732 = vsel %vm1647, %v1731, 0
        %1734 = vmatprep.subr.mxu0 0.0
        %1735 = vmatpush1.msra.mxu0 0.0
        %1736 = vmatprep.subr.mxu0 0.0
        %1737 = vmatpush1.msra.mxu0 0.0
        %1738 = vmatprep.subr.mxu0 0.0
        %1739 = vmatpush1.msra.mxu0 0.0
        %1740 = vmatprep.subr.mxu0 0.0
        %1741 = vmatpush1.msra.mxu0 0.0
        %1742 = vmatprep.subr.mxu0 0.0
        %1743 = vmatpush1.msra.mxu0 0.0
        %1744 = vmatprep.subr.mxu0 0.0
        %1745 = vmatpush1.msra.mxu0 0.0
        %1746 = vmatprep.subr.mxu0 0.0
        %1747 = vmatpush1.msra.mxu0 0.0
        %1748 = vmatprep.subr.mxu0 0.0
        %1749 = vmatpush1.msra.mxu0 0.0
        %1750 = vmatprep.subr.mxu0 0.0
        %1751 = vmatpush1.msra.mxu0 %v1730
        %1752 = vmatprep.subr.mxu0 0.0
        %1753 = vmatpush1.msra.mxu0 %v1729
        %1754 = vmatprep.subr.mxu0 0.0
        %1755 = vmatpush1.msra.mxu0 %v1728
        %1756 = vmatprep.subr.mxu0 0.0
        %1757 = vmatpush1.msra.mxu0 %v1727
        %1758 = vmatprep.subr.mxu0 0.0
        %1759 = vmatpush1.msra.mxu0 %v1726
        %1760 = vmatprep.subr.mxu0 0.0
        %1761 = vmatpush1.msra.mxu0 %v1725
        %1762 = vmatprep.subr.mxu0 0.0
        %1763 = vmatpush1.msra.mxu0 %v1724
        %1764 = vmatprep.subr.mxu0 0.0
        %1765 = vmatpush1.msra.mxu0 %v1723
        %1766 = vmatprep.subr.mxu0 0.0
        %1767 = vmatpush2.msra.mxu0 0.0
        %1768 = vmatprep.subr.mxu0 0.0
        %1769 = vmatpush2.msra.mxu0 0.0
        %1770 = vmatprep.subr.mxu0 0.0
        %1771 = vmatpush2.msra.mxu0 0.0
        %1772 = vmatprep.subr.mxu0 0.0
        %1773 = vmatpush2.msra.mxu0 0.0
        %1774 = vmatprep.subr.mxu0 0.0
        %1775 = vmatpush2.msra.mxu0 0.0
        %1776 = vmatprep.subr.mxu0 0.0
        %1777 = vmatpush2.msra.mxu0 0.0
        %1778 = vmatprep.subr.mxu0 0.0
        %1779 = vmatpush2.msra.mxu0 0.0
        %1780 = vmatprep.subr.mxu0 0.0
        %1781 = vmatpush2.msra.mxu0 0.0
        %1782 = vmatprep.subr.mxu0 0.0
        %1783 = vmatpush2.msra.mxu0 0.0
        %1784 = vmatprep.subr.mxu0 0.0
        %1785 = vmatpush2.msra.mxu0 0.0
        %1786 = vmatprep.subr.mxu0 0.0
        %1787 = vmatpush2.msra.mxu0 0.0
        %1788 = vmatprep.subr.mxu0 0.0
        %1789 = vmatpush2.msra.mxu0 0.0
        %1790 = vmatprep.subr.mxu0 0.0
        %1791 = vmatpush2.msra.mxu0 0.0
        %1792 = vmatprep.subr.mxu0 0.0
        %1793 = vmatpush2.msra.mxu0 0.0
        %1794 = vmatprep.subr.mxu0 0.0
        %1795 = vmatpush2.msra.mxu0 0.0
        %1796 = vmatprep.subr.mxu0 0.0
        %1797 = vmatpush2.msra.mxu0 0.0
        %1798 = vmatprep.mubr.f32.mxu0 0.0
        %1799 = vmatmul.mubr.f32.gmra.mxu0 %v1732
        %v1800 = vpop.f32.mrf.mxu0
        %v1801 = vadd.f32 0.0, %v1800
        %v1802 = vpop.f32.mrf.mxu0
        %1803 = vdwg.mxu0
        %v1804 = vadd.f32 %v1721, %v1801
        %s1805 = scalar_lea.vmem %s10, 128
        %v1806 = vld [vmem:[%s1805] sm:$0xff]
        %v1807 = vld [vmem:[%s1805 + $0x8] sm:$0xff]
        %v1808 = vld [vmem:[%s1805 + $0x10] sm:$0xff]
        %v1809 = vld [vmem:[%s1805 + $0x18] sm:$0xff]
        %v1810 = vld [vmem:[%s1805 + $0x20] sm:$0xff]
        %v1811 = vld [vmem:[%s1805 + $0x28] sm:$0xff]
        %v1812 = vld [vmem:[%s1805 + $0x30] sm:$0xff]
        %v1813 = vld [vmem:[%s1805 + $0x38] sm:$0xff]
        %v1814 = vrot.slane %v1637, 4
        %v1815 = vsel %vm1647, %v1814, 0
        %1817 = vmatprep.subr.mxu0 0.0
        %1818 = vmatpush1.msra.mxu0 0.0
        %1819 = vmatprep.subr.mxu0 0.0
        %1820 = vmatpush1.msra.mxu0 0.0
        %1821 = vmatprep.subr.mxu0 0.0
        %1822 = vmatpush1.msra.mxu0 0.0
        %1823 = vmatprep.subr.mxu0 0.0
        %1824 = vmatpush1.msra.mxu0 0.0
        %1825 = vmatprep.subr.mxu0 0.0
        %1826 = vmatpush1.msra.mxu0 0.0
        %1827 = vmatprep.subr.mxu0 0.0
        %1828 = vmatpush1.msra.mxu0 0.0
        %1829 = vmatprep.subr.mxu0 0.0
        %1830 = vmatpush1.msra.mxu0 0.0
        %1831 = vmatprep.subr.mxu0 0.0
        %1832 = vmatpush1.msra.mxu0 0.0
        %1833 = vmatprep.subr.mxu0 0.0
        %1834 = vmatpush1.msra.mxu0 %v1813
        %1835 = vmatprep.subr.mxu0 0.0
        %1836 = vmatpush1.msra.mxu0 %v1812
        %1837 = vmatprep.subr.mxu0 0.0
        %1838 = vmatpush1.msra.mxu0 %v1811
        %1839 = vmatprep.subr.mxu0 0.0
        %1840 = vmatpush1.msra.mxu0 %v1810
        %1841 = vmatprep.subr.mxu0 0.0
        %1842 = vmatpush1.msra.mxu0 %v1809
        %1843 = vmatprep.subr.mxu0 0.0
        %1844 = vmatpush1.msra.mxu0 %v1808
        %1845 = vmatprep.subr.mxu0 0.0
        %1846 = vmatpush1.msra.mxu0 %v1807
        %1847 = vmatprep.subr.mxu0 0.0
        %1848 = vmatpush1.msra.mxu0 %v1806
        %1849 = vmatprep.subr.mxu0 0.0
        %1850 = vmatpush2.msra.mxu0 0.0
        %1851 = vmatprep.subr.mxu0 0.0
        %1852 = vmatpush2.msra.mxu0 0.0
        %1853 = vmatprep.subr.mxu0 0.0
        %1854 = vmatpush2.msra.mxu0 0.0
        %1855 = vmatprep.subr.mxu0 0.0
        %1856 = vmatpush2.msra.mxu0 0.0
        %1857 = vmatprep.subr.mxu0 0.0
        %1858 = vmatpush2.msra.mxu0 0.0
        %1859 = vmatprep.subr.mxu0 0.0
        %1860 = vmatpush2.msra.mxu0 0.0
        %1861 = vmatprep.subr.mxu0 0.0
        %1862 = vmatpush2.msra.mxu0 0.0
        %1863 = vmatprep.subr.mxu0 0.0
        %1864 = vmatpush2.msra.mxu0 0.0
        %1865 = vmatprep.subr.mxu0 0.0
        %1866 = vmatpush2.msra.mxu0 0.0
        %1867 = vmatprep.subr.mxu0 0.0
        %1868 = vmatpush2.msra.mxu0 0.0
        %1869 = vmatprep.subr.mxu0 0.0
        %1870 = vmatpush2.msra.mxu0 0.0
        %1871 = vmatprep.subr.mxu0 0.0
        %1872 = vmatpush2.msra.mxu0 0.0
        %1873 = vmatprep.subr.mxu0 0.0
        %1874 = vmatpush2.msra.mxu0 0.0
        %1875 = vmatprep.subr.mxu0 0.0
        %1876 = vmatpush2.msra.mxu0 0.0
        %1877 = vmatprep.subr.mxu0 0.0
        %1878 = vmatpush2.msra.mxu0 0.0
        %1879 = vmatprep.subr.mxu0 0.0
        %1880 = vmatpush2.msra.mxu0 0.0
        %1881 = vmatprep.mubr.f32.mxu0 0.0
        %1882 = vmatmul.mubr.f32.gmra.mxu0 %v1815
        %v1883 = vpop.f32.mrf.mxu0
        %v1884 = vadd.f32 0.0, %v1883
        %v1885 = vpop.f32.mrf.mxu0
        %1886 = vdwg.mxu0
        %v1887 = vadd.f32 %v1804, %v1884
        %s1888 = scalar_lea.vmem %s10, 192
        %v1889 = vld [vmem:[%s1888] sm:$0xff]
        %v1890 = vld [vmem:[%s1888 + $0x8] sm:$0xff]
        %v1891 = vld [vmem:[%s1888 + $0x10] sm:$0xff]
        %v1892 = vld [vmem:[%s1888 + $0x18] sm:$0xff]
        %v1893 = vld [vmem:[%s1888 + $0x20] sm:$0xff]
        %v1894 = vld [vmem:[%s1888 + $0x28] sm:$0xff]
        %v1895 = vld [vmem:[%s1888 + $0x30] sm:$0xff]
        %v1896 = vld [vmem:[%s1888 + $0x38] sm:$0xff]
        %v1897 = vrot.slane %v1637, 6
        %v1898 = vsel %vm1647, %v1897, 0
        %1900 = vmatprep.subr.mxu0 0.0
        %1901 = vmatpush1.msra.mxu0 0.0
        %1902 = vmatprep.subr.mxu0 0.0
        %1903 = vmatpush1.msra.mxu0 0.0
        %1904 = vmatprep.subr.mxu0 0.0
        %1905 = vmatpush1.msra.mxu0 0.0
        %1906 = vmatprep.subr.mxu0 0.0
        %1907 = vmatpush1.msra.mxu0 0.0
        %1908 = vmatprep.subr.mxu0 0.0
        %1909 = vmatpush1.msra.mxu0 0.0
        %1910 = vmatprep.subr.mxu0 0.0
        %1911 = vmatpush1.msra.mxu0 0.0
        %1912 = vmatprep.subr.mxu0 0.0
        %1913 = vmatpush1.msra.mxu0 0.0
        %1914 = vmatprep.subr.mxu0 0.0
        %1915 = vmatpush1.msra.mxu0 0.0
        %1916 = vmatprep.subr.mxu0 0.0
        %1917 = vmatpush1.msra.mxu0 %v1896
        %1918 = vmatprep.subr.mxu0 0.0
        %1919 = vmatpush1.msra.mxu0 %v1895
        %1920 = vmatprep.subr.mxu0 0.0
        %1921 = vmatpush1.msra.mxu0 %v1894
        %1922 = vmatprep.subr.mxu0 0.0
        %1923 = vmatpush1.msra.mxu0 %v1893
        %1924 = vmatprep.subr.mxu0 0.0
        %1925 = vmatpush1.msra.mxu0 %v1892
        %1926 = vmatprep.subr.mxu0 0.0
        %1927 = vmatpush1.msra.mxu0 %v1891
        %1928 = vmatprep.subr.mxu0 0.0
        %1929 = vmatpush1.msra.mxu0 %v1890
        %1930 = vmatprep.subr.mxu0 0.0
        %1931 = vmatpush1.msra.mxu0 %v1889
        %1932 = vmatprep.subr.mxu0 0.0
        %1933 = vmatpush2.msra.mxu0 0.0
        %1934 = vmatprep.subr.mxu0 0.0
        %1935 = vmatpush2.msra.mxu0 0.0
        %1936 = vmatprep.subr.mxu0 0.0
        %1937 = vmatpush2.msra.mxu0 0.0
        %1938 = vmatprep.subr.mxu0 0.0
        %1939 = vmatpush2.msra.mxu0 0.0
        %1940 = vmatprep.subr.mxu0 0.0
        %1941 = vmatpush2.msra.mxu0 0.0
        %1942 = vmatprep.subr.mxu0 0.0
        %1943 = vmatpush2.msra.mxu0 0.0
        %1944 = vmatprep.subr.mxu0 0.0
        %1945 = vmatpush2.msra.mxu0 0.0
        %1946 = vmatprep.subr.mxu0 0.0
        %1947 = vmatpush2.msra.mxu0 0.0
        %1948 = vmatprep.subr.mxu0 0.0
        %1949 = vmatpush2.msra.mxu0 0.0
        %1950 = vmatprep.subr.mxu0 0.0
        %1951 = vmatpush2.msra.mxu0 0.0
        %1952 = vmatprep.subr.mxu0 0.0
        %1953 = vmatpush2.msra.mxu0 0.0
        %1954 = vmatprep.subr.mxu0 0.0
        %1955 = vmatpush2.msra.mxu0 0.0
        %1956 = vmatprep.subr.mxu0 0.0
        %1957 = vmatpush2.msra.mxu0 0.0
        %1958 = vmatprep.subr.mxu0 0.0
        %1959 = vmatpush2.msra.mxu0 0.0
        %1960 = vmatprep.subr.mxu0 0.0
        %1961 = vmatpush2.msra.mxu0 0.0
        %1962 = vmatprep.subr.mxu0 0.0
        %1963 = vmatpush2.msra.mxu0 0.0
        %1964 = vmatprep.mubr.f32.mxu0 0.0
        %1965 = vmatmul.mubr.f32.gmra.mxu0 %v1898
        %v1966 = vpop.f32.mrf.mxu0
        %v1967 = vadd.f32 0.0, %v1966
        %v1968 = vpop.f32.mrf.mxu0
        %1969 = vdwg.mxu0
        %v1970 = vadd.f32 %v1887, %v1967
        %v1971 = vmax.f32 %v1970, 0.0
        %v1972 = vld [vmem:[%s12] sm:$0xff]
        %v1973 = vld [vmem:[%s12 + $0x8] sm:$0xff]
        %v1974 = vld [vmem:[%s12 + $0x10] sm:$0xff]
        %v1975 = vld [vmem:[%s12 + $0x18] sm:$0xff]
        %v1976 = vld [vmem:[%s12 + $0x20] sm:$0xff]
        %v1977 = vld [vmem:[%s12 + $0x28] sm:$0xff]
        %v1978 = vld [vmem:[%s12 + $0x30] sm:$0xff]
        %v1979 = vld [vmem:[%s12 + $0x38] sm:$0xff]
        %v1980 = vld [vmem:[%s13] sm:$0x1]
        %v1982 = vsel %vm1647, %v1971, 0
        %1984 = vmatprep.subr.mxu0 0.0
        %1985 = vmatpush1.msra.mxu0 0.0
        %1986 = vmatprep.subr.mxu0 0.0
        %1987 = vmatpush1.msra.mxu0 0.0
        %1988 = vmatprep.subr.mxu0 0.0
        %1989 = vmatpush1.msra.mxu0 0.0
        %1990 = vmatprep.subr.mxu0 0.0
        %1991 = vmatpush1.msra.mxu0 0.0
        %1992 = vmatprep.subr.mxu0 0.0
        %1993 = vmatpush1.msra.mxu0 0.0
        %1994 = vmatprep.subr.mxu0 0.0
        %1995 = vmatpush1.msra.mxu0 0.0
        %1996 = vmatprep.subr.mxu0 0.0
        %1997 = vmatpush1.msra.mxu0 0.0
        %1998 = vmatprep.subr.mxu0 0.0
        %1999 = vmatpush1.msra.mxu0 0.0
        %2000 = vmatprep.subr.mxu0 0.0
        %2001 = vmatpush1.msra.mxu0 %v1979
        %2002 = vmatprep.subr.mxu0 0.0
        %2003 = vmatpush1.msra.mxu0 %v1978
        %2004 = vmatprep.subr.mxu0 0.0
        %2005 = vmatpush1.msra.mxu0 %v1977
        %2006 = vmatprep.subr.mxu0 0.0
        %2007 = vmatpush1.msra.mxu0 %v1976
        %2008 = vmatprep.subr.mxu0 0.0
        %2009 = vmatpush1.msra.mxu0 %v1975
        %2010 = vmatprep.subr.mxu0 0.0
        %2011 = vmatpush1.msra.mxu0 %v1974
        %2012 = vmatprep.subr.mxu0 0.0
        %2013 = vmatpush1.msra.mxu0 %v1973
        %2014 = vmatprep.subr.mxu0 0.0
        %2015 = vmatpush1.msra.mxu0 %v1972
        %2016 = vmatprep.subr.mxu0 0.0
        %2017 = vmatpush2.msra.mxu0 0.0
        %2018 = vmatprep.subr.mxu0 0.0
        %2019 = vmatpush2.msra.mxu0 0.0
        %2020 = vmatprep.subr.mxu0 0.0
        %2021 = vmatpush2.msra.mxu0 0.0
        %2022 = vmatprep.subr.mxu0 0.0
        %2023 = vmatpush2.msra.mxu0 0.0
        %2024 = vmatprep.subr.mxu0 0.0
        %2025 = vmatpush2.msra.mxu0 0.0
        %2026 = vmatprep.subr.mxu0 0.0
        %2027 = vmatpush2.msra.mxu0 0.0
        %2028 = vmatprep.subr.mxu0 0.0
        %2029 = vmatpush2.msra.mxu0 0.0
        %2030 = vmatprep.subr.mxu0 0.0
        %2031 = vmatpush2.msra.mxu0 0.0
        %2032 = vmatprep.subr.mxu0 0.0
        %2033 = vmatpush2.msra.mxu0 0.0
        %2034 = vmatprep.subr.mxu0 0.0
        %2035 = vmatpush2.msra.mxu0 0.0
        %2036 = vmatprep.subr.mxu0 0.0
        %2037 = vmatpush2.msra.mxu0 0.0
        %2038 = vmatprep.subr.mxu0 0.0
        %2039 = vmatpush2.msra.mxu0 0.0
        %2040 = vmatprep.subr.mxu0 0.0
        %2041 = vmatpush2.msra.mxu0 0.0
        %2042 = vmatprep.subr.mxu0 0.0
        %2043 = vmatpush2.msra.mxu0 0.0
        %2044 = vmatprep.subr.mxu0 0.0
        %2045 = vmatpush2.msra.mxu0 0.0
        %2046 = vmatprep.subr.mxu0 0.0
        %2047 = vmatpush2.msra.mxu0 0.0
        %2048 = vmatprep.mubr.f32.mxu0 0.0
        %2049 = vmatmul.mubr.f32.gmra.mxu0 %v1982
        %v2050 = vpop.f32.mrf.mxu0
        %v2051 = vadd.f32 %v1980, %v2050
        %v2052 = vpop.f32.mrf.mxu0
        %2053 = vdwg.mxu0
        %v2054 = vmax.f32 %v2051, 0.0
        %vm2055 = vcmask 516096
        %2056 = vst.msk [vmem:[%s598] sm:$0x1] %vm2055, %v2054
        %v2057 = vld [vmem:[%s14] sm:$0xff]
        %v2058 = vld [vmem:[%s14 + $0x8] sm:$0xff]
        %v2059 = vld [vmem:[%s14 + $0x10] sm:$0xff]
        %v2060 = vld [vmem:[%s14 + $0x18] sm:$0xff]
        %v2061 = vld [vmem:[%s14 + $0x20] sm:$0xff]
        %v2062 = vld [vmem:[%s14 + $0x28] sm:$0xff]
        %v2063 = vld [vmem:[%s14 + $0x30] sm:$0xff]
        %v2064 = vld [vmem:[%s14 + $0x38] sm:$0xff]
        %v2065 = vld [vmem:[%s15] sm:$0x1]
        %v2067 = vsel %vm1647, %v2054, 0
        %2069 = vmatprep.subr.mxu0 0.0
        %2070 = vmatpush1.msra.mxu0 0.0
        %2071 = vmatprep.subr.mxu0 0.0
        %2072 = vmatpush1.msra.mxu0 0.0
        %2073 = vmatprep.subr.mxu0 0.0
        %2074 = vmatpush1.msra.mxu0 0.0
        %2075 = vmatprep.subr.mxu0 0.0
        %2076 = vmatpush1.msra.mxu0 0.0
        %2077 = vmatprep.subr.mxu0 0.0
        %2078 = vmatpush1.msra.mxu0 0.0
        %2079 = vmatprep.subr.mxu0 0.0
        %2080 = vmatpush1.msra.mxu0 0.0
        %2081 = vmatprep.subr.mxu0 0.0
        %2082 = vmatpush1.msra.mxu0 0.0
        %2083 = vmatprep.subr.mxu0 0.0
        %2084 = vmatpush1.msra.mxu0 0.0
        %2085 = vmatprep.subr.mxu0 0.0
        %2086 = vmatpush1.msra.mxu0 %v2064
        %2087 = vmatprep.subr.mxu0 0.0
        %2088 = vmatpush1.msra.mxu0 %v2063
        %2089 = vmatprep.subr.mxu0 0.0
        %2090 = vmatpush1.msra.mxu0 %v2062
        %2091 = vmatprep.subr.mxu0 0.0
        %2092 = vmatpush1.msra.mxu0 %v2061
        %2093 = vmatprep.subr.mxu0 0.0
        %2094 = vmatpush1.msra.mxu0 %v2060
        %2095 = vmatprep.subr.mxu0 0.0
        %2096 = vmatpush1.msra.mxu0 %v2059
        %2097 = vmatprep.subr.mxu0 0.0
        %2098 = vmatpush1.msra.mxu0 %v2058
        %2099 = vmatprep.subr.mxu0 0.0
        %2100 = vmatpush1.msra.mxu0 %v2057
        %2101 = vmatprep.subr.mxu0 0.0
        %2102 = vmatpush2.msra.mxu0 0.0
        %2103 = vmatprep.subr.mxu0 0.0
        %2104 = vmatpush2.msra.mxu0 0.0
        %2105 = vmatprep.subr.mxu0 0.0
        %2106 = vmatpush2.msra.mxu0 0.0
        %2107 = vmatprep.subr.mxu0 0.0
        %2108 = vmatpush2.msra.mxu0 0.0
        %2109 = vmatprep.subr.mxu0 0.0
        %2110 = vmatpush2.msra.mxu0 0.0
        %2111 = vmatprep.subr.mxu0 0.0
        %2112 = vmatpush2.msra.mxu0 0.0
        %2113 = vmatprep.subr.mxu0 0.0
        %2114 = vmatpush2.msra.mxu0 0.0
        %2115 = vmatprep.subr.mxu0 0.0
        %2116 = vmatpush2.msra.mxu0 0.0
        %2117 = vmatprep.subr.mxu0 0.0
        %2118 = vmatpush2.msra.mxu0 0.0
        %2119 = vmatprep.subr.mxu0 0.0
        %2120 = vmatpush2.msra.mxu0 0.0
        %2121 = vmatprep.subr.mxu0 0.0
        %2122 = vmatpush2.msra.mxu0 0.0
        %2123 = vmatprep.subr.mxu0 0.0
        %2124 = vmatpush2.msra.mxu0 0.0
        %2125 = vmatprep.subr.mxu0 0.0
        %2126 = vmatpush2.msra.mxu0 0.0
        %2127 = vmatprep.subr.mxu0 0.0
        %2128 = vmatpush2.msra.mxu0 0.0
        %2129 = vmatprep.subr.mxu0 0.0
        %2130 = vmatpush2.msra.mxu0 0.0
        %2131 = vmatprep.subr.mxu0 0.0
        %2132 = vmatpush2.msra.mxu0 0.0
        %2133 = vmatprep.mubr.f32.mxu0 0.0
        %2134 = vmatmul.mubr.f32.gmra.mxu0 %v2067
        %v2135 = vpop.f32.mrf.mxu0
        %v2136 = vadd.f32 %v2065, %v2135
        %v2137 = vpop.f32.mrf.mxu0
        %2138 = vdwg.mxu0
        %v2139 = vmax.f32 %v2136, 0.0
        %v2140 = vld [vmem:[%s16] sm:$0xff]
        %v2141 = vld [vmem:[%s16 + $0x8] sm:$0xff]
        %v2142 = vld [vmem:[%s16 + $0x10] sm:$0xff]
        %v2143 = vld [vmem:[%s16 + $0x18] sm:$0xff]
        %v2144 = vld [vmem:[%s17] sm:$0x1]
        %vm2145 = vcmask 261120
        %v2147 = vsel %vm2145, %v2139, 0
        %2149 = vmatprep.subr.mxu0 0.0
        %2150 = vmatpush1.msra.mxu0 0.0
        %2151 = vmatprep.subr.mxu0 0.0
        %2152 = vmatpush1.msra.mxu0 0.0
        %2153 = vmatprep.subr.mxu0 0.0
        %2154 = vmatpush1.msra.mxu0 0.0
        %2155 = vmatprep.subr.mxu0 0.0
        %2156 = vmatpush1.msra.mxu0 0.0
        %2157 = vmatprep.subr.mxu0 0.0
        %2158 = vmatpush1.msra.mxu0 0.0
        %2159 = vmatprep.subr.mxu0 0.0
        %2160 = vmatpush1.msra.mxu0 0.0
        %2161 = vmatprep.subr.mxu0 0.0
        %2162 = vmatpush1.msra.mxu0 0.0
        %2163 = vmatprep.subr.mxu0 0.0
        %2164 = vmatpush1.msra.mxu0 0.0
        %2165 = vmatprep.subr.mxu0 0.0
        %2166 = vmatpush1.msra.mxu0 0.0
        %2167 = vmatprep.subr.mxu0 0.0
        %2168 = vmatpush1.msra.mxu0 0.0
        %2169 = vmatprep.subr.mxu0 0.0
        %2170 = vmatpush1.msra.mxu0 0.0
        %2171 = vmatprep.subr.mxu0 0.0
        %2172 = vmatpush1.msra.mxu0 0.0
        %2173 = vmatprep.subr.mxu0 0.0
        %2174 = vmatpush1.msra.mxu0 %v2143
        %2175 = vmatprep.subr.mxu0 0.0
        %2176 = vmatpush1.msra.mxu0 %v2142
        %2177 = vmatprep.subr.mxu0 0.0
        %2178 = vmatpush1.msra.mxu0 %v2141
        %2179 = vmatprep.subr.mxu0 0.0
        %2180 = vmatpush1.msra.mxu0 %v2140
        %2181 = vmatprep.subr.mxu0 0.0
        %2182 = vmatpush2.msra.mxu0 0.0
        %2183 = vmatprep.subr.mxu0 0.0
        %2184 = vmatpush2.msra.mxu0 0.0
        %2185 = vmatprep.subr.mxu0 0.0
        %2186 = vmatpush2.msra.mxu0 0.0
        %2187 = vmatprep.subr.mxu0 0.0
        %2188 = vmatpush2.msra.mxu0 0.0
        %2189 = vmatprep.subr.mxu0 0.0
        %2190 = vmatpush2.msra.mxu0 0.0
        %2191 = vmatprep.subr.mxu0 0.0
        %2192 = vmatpush2.msra.mxu0 0.0
        %2193 = vmatprep.subr.mxu0 0.0
        %2194 = vmatpush2.msra.mxu0 0.0
        %2195 = vmatprep.subr.mxu0 0.0
        %2196 = vmatpush2.msra.mxu0 0.0
        %2197 = vmatprep.subr.mxu0 0.0
        %2198 = vmatpush2.msra.mxu0 0.0
        %2199 = vmatprep.subr.mxu0 0.0
        %2200 = vmatpush2.msra.mxu0 0.0
        %2201 = vmatprep.subr.mxu0 0.0
        %2202 = vmatpush2.msra.mxu0 0.0
        %2203 = vmatprep.subr.mxu0 0.0
        %2204 = vmatpush2.msra.mxu0 0.0
        %2205 = vmatprep.subr.mxu0 0.0
        %2206 = vmatpush2.msra.mxu0 0.0
        %2207 = vmatprep.subr.mxu0 0.0
        %2208 = vmatpush2.msra.mxu0 0.0
        %2209 = vmatprep.subr.mxu0 0.0
        %2210 = vmatpush2.msra.mxu0 0.0
        %2211 = vmatprep.subr.mxu0 0.0
        %2212 = vmatpush2.msra.mxu0 0.0
        %2213 = vmatprep.mubr.f32.mxu0 0.0
        %2214 = vmatmul.mubr.f32.gmra.mxu0 %v2147
        %v2215 = vpop.f32.mrf.mxu0
        %v2216 = vadd.f32 %v2144, %v2215
        %v2217 = vpop.f32.mrf.mxu0
        %2218 = vdwg.mxu0
        %v2219 = vtanh.pop %v2216
        %vm2220 = vcmask 122880
        %2221 = vst.msk [vmem:[%s604] sm:$0x1] %vm2220, %v2219
        %s2222 = sand.u32 %s428, 1
        %s2223 = scalar_lea.sflag [#allocation3], %s2222
        %s2224 = sand.u32 %s428, 1
        %s2225 = scalar_lea.vmem [#allocation2], %s2224
        %s2226 = sand.u32 %s454, 1
        %s2227 = scalar_lea.sflag [#allocation5], %s2226
        %s2228 = sand.u32 %s454, 1
        %s2229 = scalar_lea.vmem [#allocation4], %s2228
        // Predicated region
        $region93: #{cnnnet_forward.1} parent=91 // pred_check
          %p2230 = pneg %p438
        $region94: #{cnnnet_forward.1} parent=91 // pred_check_branch
          %2232 = sbr.rel (%p2230) target = $region96
        $region95: #{cnnnet_forward.1} parent=91 // pred_region
          %s2234 = ssub.s32 16, 16
          %2235 = vsyncadd %s2223, %s2234
          %s2236 = smul.addr %s37, 16
          %s2237 = scalar_lea.hbm %s18, %s2236
          %s2239 = sshll.u32 %s2225, 4
          %s2240 = int_to_ptr.vmem [resolvable:$true] %s2239
          %2242 = dma.vmem_to_hbm [thread:$0]  %s2240, 16, %s2237, %s2223
        $region96: #{cnnnet_forward.1} parent=91 // pred_fallthru
          _
        // Predicated region
        $region97: #{cnnnet_forward.1} parent=91 // pred_check
          %p2243 = pneg %p464
        $region98: #{cnnnet_forward.1} parent=91 // pred_check_branch
          %2245 = sbr.rel (%p2243) target = $region100
        $region99: #{cnnnet_forward.1} parent=91 // pred_region
          %s2247 = ssub.s32 16, 16
          %2248 = vsyncadd %s2227, %s2247
          %s2249 = smul.addr %s37, 16
          %s2250 = scalar_lea.hbm %s19, %s2249
          %s2252 = sshll.u32 %s2229, 4
          %s2253 = int_to_ptr.vmem [resolvable:$true] %s2252
          %2255 = dma.vmem_to_hbm [thread:$0]  %s2253, 16, %s2250, %s2227
        $region100: #{cnnnet_forward.1} parent=91 // pred_fallthru
          _
      $region92: #{cnnnet_forward.1} parent=5 // pred_fallthru
        _
      %p2256 = scmp.le.s32.totalorder 2, %s32
      // Predicated region
      $region101: #{cnnnet_forward.1} parent=5 // pred_check
        %p2257 = pneg %p2256
      $region102: #{cnnnet_forward.1} parent=5 // pred_check_branch
        %2259 = sbr.rel (%p2257) target = $region104
      $region103: #{cnnnet_forward.1} parent=5 // pred_region
        %s2260 = ssub.s32 %s32, 2
        // Predicated region
        $region105: #{cnnnet_forward.1} parent=103 // pred_check
          %p2261 = pneg %p444
        $region106: #{cnnnet_forward.1} parent=103 // pred_check_branch
          %2263 = sbr.rel (%p2261) target = $region108
        $region107: #{cnnnet_forward.1} parent=103 // pred_region
          %s2264 = sand.u32 %s429, 1
          %s2265 = scalar_lea.sflag [#allocation3], %s2264
          %s2266 = sand.u32 %s429, 1
          %s2267 = scalar_lea.vmem [#allocation2], %s2266
          %2268 = dma.done %s2265, 16
        $region108: #{cnnnet_forward.1} parent=103 // pred_fallthru
          _
        // Predicated region
        $region109: #{cnnnet_forward.1} parent=103 // pred_check
          %p2269 = pneg %p470
        $region110: #{cnnnet_forward.1} parent=103 // pred_check_branch
          %2271 = sbr.rel (%p2269) target = $region112
        $region111: #{cnnnet_forward.1} parent=103 // pred_region
          %s2272 = sand.u32 %s455, 1
          %s2273 = scalar_lea.sflag [#allocation5], %s2272
          %s2274 = sand.u32 %s455, 1
          %s2275 = scalar_lea.vmem [#allocation4], %s2274
          %2276 = dma.done %s2273, 16
        $region112: #{cnnnet_forward.1} parent=103 // pred_fallthru
          _
      $region104: #{cnnnet_forward.1} parent=5 // pred_fallthru
        _
    $region6: #{cnnnet_forward.1} parent=1 // loop_footer
      %s36 = sadd.s32 1, %s32
    $region7: #{cnnnet_forward.1} parent=1 // loop_footer_branch
      %31 = sbr.rel target = $region3
    $region8: #{cnnnet_forward.1} parent=1 // loop_exit
      _
    %2277 = vsyncpa [#allocation3], 1
    %s2278 = scalar_lea.sflag [#allocation3], 1
    %2279 = vsyncpa %s2278, 1
    %2280 = vsyncpa [#allocation5], 1
    %s2281 = scalar_lea.sflag [#allocation5], 1
    %2282 = vsyncpa %s2281, 1

</llo_original>
